<compile_context>
chip_gen: v6e
topology: v6e:2x2x1
jax: 0.10.0
libtpu: 0.0.40
codegen_flags: <defaults>
</compile_context>

<pallas_src>
import jax
import jax.numpy as jnp
from jax.experimental import pallas as pl
from jax.experimental.pallas import tpu as pltpu


def _rgcn_layer_kernel(h_all_ref,    # VMEM (N, in_dim)        bf16, grid-invariant
                       h_tile_ref,   # VMEM (TM, in_dim)       bf16, per row tile
                       adj_ref,      # VMEM (1, TM, N)         bf16, per (tile, rel)
                       w_ref,        # VMEM (1, in_dim, out)   bf16, per relation
                       w_loop_ref,   # VMEM (in_dim, out)      bf16, grid-invariant
                       bias_ref,     # VMEM (1, out)           f32,  grid-invariant
                       out_ref):     # VMEM (TM, out)          f32, resident over rel
    rl = pl.program_id(1)

    # First relation step for this row tile: seed the accumulator with the
    # self-loop term + bias (avoids a zero-fill pass and an epilogue matmul).
    @pl.when(rl == 0)
    def _():
        self_loop = jnp.dot(h_tile_ref[...], w_loop_ref[...],
                            preferred_element_type=jnp.float32)
        out_ref[...] = self_loop + bias_ref[...]

    # Messages for this relation over ALL source nodes, then aggregate the
    # current row tile with the normalized adjacency strip.
    msg = jnp.dot(h_all_ref[...], w_ref[0],
                  preferred_element_type=jnp.float32)            # (N, out) f32
    out_ref[...] += jnp.dot(adj_ref[0], msg.astype(jnp.bfloat16),
                            preferred_element_type=jnp.float32)  # (TM, out)

    # Last relation: ReLU in place.  (Output stays f32 — required because we
    # accumulate directly into out_ref instead of a scratch buffer.)
    @pl.when(rl == pl.num_programs(1) - 1)
    def _():
        out_ref[...] = jnp.maximum(out_ref[...], 0.0)


def rgcn_layer(h, adj_bf16, w_rel_bf16, w_loop_bf16, bias, *, tile_m=128):
    """One RelGraphConv layer. h: (N, in_dim) f32 -> (N, out_dim) f32."""
    n, in_dim = h.shape
    num_rels = adj_bf16.shape[0]
    out_dim = w_rel_bf16.shape[-1]

    # Pick the largest row tile that divides N (fallback: whole array).
    tm = n
    for cand in (256, 128, 64, 32, 16, 8):
        if cand <= n and n % cand == 0:
            tm = cand
            break

    hb = h.astype(jnp.bfloat16)

    grid_spec = pltpu.PrefetchScalarGridSpec(
        num_scalar_prefetch=0,
        grid=(n // tm, num_rels),                                   # rel axis last
        in_specs=[
            pl.BlockSpec((n, in_dim), lambda i, rl: (0, 0)),        # h (full, src)
            pl.BlockSpec((tm, in_dim), lambda i, rl: (i, 0)),       # h row tile
            # (optional) pipeline_mode=pl.Buffered(3) on adj once profiled.
            pl.BlockSpec((1, tm, n), lambda i, rl: (rl, i, 0)),     # adj strip
            pl.BlockSpec((1, in_dim, out_dim),
                         lambda i, rl: (rl, 0, 0)),                 # W_r
            pl.BlockSpec((in_dim, out_dim), lambda i, rl: (0, 0)),  # W_loop
            pl.BlockSpec((1, out_dim), lambda i, rl: (0, 0)),       # bias
        ],
        out_specs=pl.BlockSpec((tm, out_dim), lambda i, rl: (i, 0)),  # resident acc
    )

    return pl.pallas_call(
        _rgcn_layer_kernel,
        out_shape=jax.ShapeDtypeStruct((n, out_dim), jnp.float32),
        grid_spec=grid_spec,
        compiler_params=pltpu.CompilerParams(
            # row tiles shard across TensorCores (v7x); relation axis = reduction
            dimension_semantics=("parallel", "arbitrary"),
            # above 16/32 MiB defaults, below v7x's 64 MiB physical VMEM
            vmem_limit_bytes=48 * 1024 * 1024),
    )(hb, hb, adj_bf16, w_rel_bf16, w_loop_bf16, bias)


class BaseRGCNPallas:
    """Mirrors BaseRGCN: builds `num_hidden_layers` RelGraphConv layers
    (input/output layers are None in the base class) and chains them in forward.
    dropout=0 -> identity; use_self_loop handled via W_loop."""

    def __init__(self, num_nodes, h_dim, out_dim, num_rels, num_bases,
                 num_hidden_layers=1, dropout=0, use_self_loop=True, key=None):
        self.num_nodes = num_nodes
        self.h_dim = h_dim
        self.out_dim = out_dim
        self.num_rels = num_rels
        self.num_bases = num_rels if num_bases < 0 else num_bases
        self.num_hidden_layers = num_hidden_layers
        self.use_self_loop = use_self_loop
        key = jax.random.PRNGKey(0) if key is None else key

        self.layers = []
        for _ in range(num_hidden_layers):
            key, k1, k2, k3, k4 = jax.random.split(key, 5)
            scale = 1.0 / jnp.sqrt(jnp.float32(h_dim))
            bases = jax.random.normal(k1, (self.num_bases, h_dim, h_dim),
                                      jnp.float32) * scale
            coef = jax.random.normal(k2, (num_rels, self.num_bases),
                                     jnp.float32) * scale
            # Basis combine hoisted out of the kernel (done once per layer).
            w_rel = jnp.einsum("rb,bio->rio", coef, bases)
            w_loop = jax.random.normal(k3, (h_dim, h_dim), jnp.float32) * scale
            if not use_self_loop:
                w_loop = jnp.zeros_like(w_loop)
            self.layers.append(dict(
                w_rel=w_rel.astype(jnp.bfloat16),
                w_loop=w_loop.astype(jnp.bfloat16),
                bias=jax.random.normal(k4, (1, h_dim), jnp.float32) * 0.01,
            ))

    def forward(self, adj_bf16, h):
        for p in self.layers:
            h = rgcn_layer(h, adj_bf16, p["w_rel"], p["w_loop"], p["bias"])
        return h


def _reference_layer(h, adj_bf16, w_rel_bf16, w_loop_bf16, bias):
    """Pure-JAX reference mirroring the kernel numerics (bf16 operands,
    bf16-rounded messages, f32 accumulation)."""
    hb = h.astype(jnp.bfloat16).astype(jnp.float32)
    w = w_rel_bf16.astype(jnp.float32)
    adj = adj_bf16.astype(jnp.float32)
    msg = jnp.einsum("nd,rdo->rno", hb, w)                       # (R, N, out)
    msg = msg.astype(jnp.bfloat16).astype(jnp.float32)           # kernel rounds msg
    agg = jnp.einsum("rij,rjo->io", adj, msg)                    # (N, out)
    self_loop = hb @ w_loop_bf16.astype(jnp.float32)
    return jnp.maximum(agg + self_loop + bias, 0.0)


if __name__ == "__main__":
    # Small but lane-dense, MXU-friendly shapes (feature dims multiple of 128).
    NUM_NODES, H_DIM, NUM_RELS, NUM_BASES, NUM_LAYERS = 256, 128, 4, 2, 2

    key = jax.random.PRNGKey(0)
    key, kh, ka = jax.random.split(key, 3)

    # Node features.
    h0 = jax.random.normal(kh, (NUM_NODES, H_DIM), jnp.float32)

    # Dense per-relation adjacency with edge norm (1 / in-degree) folded in,
    # stored bf16 (the kernel's dominant streamed operand).
    raw = jax.random.bernoulli(ka, p=0.05,
                               shape=(NUM_RELS, NUM_NODES, NUM_NODES))
    raw = raw.astype(jnp.float32)
    in_deg = jnp.maximum(raw.sum(axis=2, keepdims=True), 1.0)
    adj = (raw / in_deg).astype(jnp.bfloat16)                    # (R, N, N) bf16

    model = BaseRGCNPallas(num_nodes=NUM_NODES, h_dim=H_DIM, out_dim=H_DIM,
                           num_rels=NUM_RELS, num_bases=NUM_BASES,
                           num_hidden_layers=NUM_LAYERS, dropout=0,
                           use_self_loop=True, key=jax.random.PRNGKey(0))

    out = jax.block_until_ready(model.forward(adj, h0))

    # Pure-JAX reference for the same stacked layers.
    h_ref = h0
    for p in model.layers:
        h_ref = _reference_layer(h_ref, adj, p["w_rel"], p["w_loop"], p["bias"])

    assert out.shape == (NUM_NODES, H_DIM)
    assert jnp.allclose(out, h_ref, rtol=1e-2, atol=1e-2), "mismatch vs reference"

    print("KERNEL_OK")
</pallas_src>

<mosaic_0001>
module attributes {stable_mosaic.version = 11 : i64} {
  func.func @_rgcn_layer_kernel(%arg0: i32, %arg1: i32, %arg2: memref<256x128xbf16, #tpu.memory_space<vmem>>, %arg3: memref<256x128xbf16, #tpu.memory_space<vmem>>, %arg4: memref<1x256x256xbf16, #tpu.memory_space<vmem>>, %arg5: memref<1x128x128xbf16, #tpu.memory_space<vmem>>, %arg6: memref<128x128xbf16, #tpu.memory_space<vmem>>, %arg7: memref<1x128xf32, #tpu.memory_space<vmem>>, %arg8: memref<256x128xf32, #tpu.memory_space<vmem>>) attributes {dimension_semantics = [#tpu.dimension_semantics<parallel>, #tpu.dimension_semantics<arbitrary>], iteration_bounds = array<i64: 1, 4>, scalar_prefetch = 0 : i64, scratch_operands = 0 : i64, tpu.core_type = #tpu.core_type<tc>, window_params = [{pipeline_mode = #tpu.pipeline_mode<synchronous>, transform_indices = @transform_0, window_bounds = array<i64: 256, 128>}, {transform_indices = @transform_1, window_bounds = array<i64: 256, 128>}, {transform_indices = @transform_2, window_bounds = array<i64: 1, 256, 256>}, {transform_indices = @transform_3, window_bounds = array<i64: 1, 128, 128>}, {pipeline_mode = #tpu.pipeline_mode<synchronous>, transform_indices = @transform_4, window_bounds = array<i64: 128, 128>}, {pipeline_mode = #tpu.pipeline_mode<synchronous>, transform_indices = @transform_5, window_bounds = array<i64: 1, 128>}, {transform_indices = @transform_6, window_bounds = array<i64: 256, 128>}]} {
    %c0_i32 = arith.constant 0 : i32
    %0 = arith.cmpi eq, %arg1, %c0_i32 : i32
    %1 = arith.extui %0 : i1 to i32
    %c0_i32_0 = arith.constant 0 : i32
    %2 = arith.cmpi ne, %1, %c0_i32_0 : i32
    scf.if %2 {
      %c0_14 = arith.constant 0 : index
      %c0_15 = arith.constant 0 : index
      %17 = vector.load %arg3[%c0_14, %c0_15] : memref<256x128xbf16, #tpu.memory_space<vmem>>, vector<256x128xbf16>
      %c0_16 = arith.constant 0 : index
      %c0_17 = arith.constant 0 : index
      %18 = vector.load %arg6[%c0_16, %c0_17] : memref<128x128xbf16, #tpu.memory_space<vmem>>, vector<128x128xbf16>
      %cst_18 = arith.constant dense<0.000000e+00> : vector<256x128xf32>
      %19 = tpu.matmul %17, %18, %cst_18 {dimension_numbers = #tpu.dot_dimension_numbers<[1], [0], [0], [1], [0, 0, 1, 1], [], []>} : vector<256x128xbf16>, vector<128x128xbf16>, vector<256x128xf32> -> vector<256x128xf32>
      %c0_19 = arith.constant 0 : index
      %c0_20 = arith.constant 0 : index
      %20 = vector.load %arg7[%c0_19, %c0_20] : memref<1x128xf32, #tpu.memory_space<vmem>>, vector<1x128xf32>
      %21 = vector.broadcast %20 : vector<1x128xf32> to vector<256x128xf32>
      %22 = arith.addf %19, %21 : vector<256x128xf32>
      %c0_21 = arith.constant 0 : index
      %c0_22 = arith.constant 0 : index
      %23 = vector.load %arg8[%c0_21, %c0_22] : memref<256x128xf32, #tpu.memory_space<vmem>>, vector<256x128xf32>
      tpu.vector_store %arg8[%c0_21, %c0_22], %22 {strides = array<i32>} : memref<256x128xf32, #tpu.memory_space<vmem>>, vector<256x128xf32>,
    } else {
    }
    %c0 = arith.constant 0 : index
    %c0_1 = arith.constant 0 : index
    %3 = vector.load %arg2[%c0, %c0_1] : memref<256x128xbf16, #tpu.memory_space<vmem>>, vector<256x128xbf16>
    %c0_2 = arith.constant 0 : index
    %c0_3 = arith.constant 0 : index
    %c0_4 = arith.constant 0 : index
    %4 = vector.load %arg5[%c0_2, %c0_3, %c0_4] : memref<1x128x128xbf16, #tpu.memory_space<vmem>>, vector<1x128x128xbf16>
    %5 = vector.shape_cast %4 : vector<1x128x128xbf16> to vector<128x128xbf16>
    %cst = arith.constant dense<0.000000e+00> : vector<256x128xf32>
    %6 = tpu.matmul %3, %5, %cst {dimension_numbers = #tpu.dot_dimension_numbers<[1], [0], [0], [1], [0, 0, 1, 1], [], []>} : vector<256x128xbf16>, vector<128x128xbf16>, vector<256x128xf32> -> vector<256x128xf32>
    %c0_5 = arith.constant 0 : index
    %c0_6 = arith.constant 0 : index
    %7 = vector.load %arg8[%c0_5, %c0_6] : memref<256x128xf32, #tpu.memory_space<vmem>>, vector<256x128xf32>
    %c0_7 = arith.constant 0 : index
    %c0_8 = arith.constant 0 : index
    %c0_9 = arith.constant 0 : index
    %8 = vector.load %arg4[%c0_7, %c0_8, %c0_9] : memref<1x256x256xbf16, #tpu.memory_space<vmem>>, vector<1x256x256xbf16>
    %9 = vector.shape_cast %8 : vector<1x256x256xbf16> to vector<256x256xbf16>
    %10 = arith.truncf %6 : vector<256x128xf32> to vector<256x128xbf16>
    %cst_10 = arith.constant dense<0.000000e+00> : vector<256x128xf32>
    %11 = tpu.matmul %9, %10, %cst_10 {dimension_numbers = #tpu.dot_dimension_numbers<[1], [0], [0], [1], [0, 0, 1, 1], [], []>} : vector<256x256xbf16>, vector<256x128xbf16>, vector<256x128xf32> -> vector<256x128xf32>
    %12 = arith.addf %7, %11 : vector<256x128xf32>
    %c0_11 = arith.constant 0 : index
    %c0_12 = arith.constant 0 : index
    %13 = vector.load %arg8[%c0_11, %c0_12] : memref<256x128xf32, #tpu.memory_space<vmem>>, vector<256x128xf32>
    tpu.vector_store %arg8[%c0_11, %c0_12], %12 {strides = array<i32>} : memref<256x128xf32, #tpu.memory_space<vmem>>, vector<256x128xf32>,
    %c3_i32 = arith.constant 3 : i32
    %14 = arith.cmpi eq, %arg1, %c3_i32 : i32
    %15 = arith.extui %14 : i1 to i32
    %c0_i32_13 = arith.constant 0 : i32
    %16 = arith.cmpi ne, %15, %c0_i32_13 : i32
    scf.if %16 {
      %c0_14 = arith.constant 0 : index
      %c0_15 = arith.constant 0 : index
      %17 = vector.load %arg8[%c0_14, %c0_15] : memref<256x128xf32, #tpu.memory_space<vmem>>, vector<256x128xf32>
      %cst_16 = arith.constant 0.000000e+00 : f32
      %18 = vector.broadcast %cst_16 : f32 to vector<256x128xf32>
      %19 = arith.maximumf %17, %18 : vector<256x128xf32>
      %c0_17 = arith.constant 0 : index
      %c0_18 = arith.constant 0 : index
      %20 = vector.load %arg8[%c0_17, %c0_18] : memref<256x128xf32, #tpu.memory_space<vmem>>, vector<256x128xf32>
      tpu.vector_store %arg8[%c0_17, %c0_18], %19 {strides = array<i32>} : memref<256x128xf32, #tpu.memory_space<vmem>>, vector<256x128xf32>,
    } else {
    }
    return
  }
  func.func @transform_0(%arg0: i32, %arg1: i32) -> (i32, i32) {
    %c0_i32 = arith.constant 0 : i32
    %c0_i32_0 = arith.constant 0 : i32
    %c0_i32_1 = arith.constant 0 : i32
    return %c0_i32, %c0_i32_0 : i32, i32
  }
  func.func @transform_1(%arg0: i32, %arg1: i32) -> (i32, i32) {
    %c0_i32 = arith.constant 0 : i32
    %c0_i32_0 = arith.constant 0 : i32
    return %arg0, %c0_i32 : i32, i32
  }
  func.func @transform_2(%arg0: i32, %arg1: i32) -> (i32, i32, i32) {
    %c0_i32 = arith.constant 0 : i32
    %c0_i32_0 = arith.constant 0 : i32
    return %arg1, %arg0, %c0_i32 : i32, i32, i32
  }
  func.func @transform_3(%arg0: i32, %arg1: i32) -> (i32, i32, i32) {
    %c0_i32 = arith.constant 0 : i32
    %c0_i32_0 = arith.constant 0 : i32
    %c0_i32_1 = arith.constant 0 : i32
    return %arg1, %c0_i32, %c0_i32_0 : i32, i32, i32
  }
  func.func @transform_4(%arg0: i32, %arg1: i32) -> (i32, i32) {
    %c0_i32 = arith.constant 0 : i32
    %c0_i32_0 = arith.constant 0 : i32
    %c0_i32_1 = arith.constant 0 : i32
    return %c0_i32, %c0_i32_0 : i32, i32
  }
  func.func @transform_5(%arg0: i32, %arg1: i32) -> (i32, i32) {
    %c0_i32 = arith.constant 0 : i32
    %c0_i32_0 = arith.constant 0 : i32
    %c0_i32_1 = arith.constant 0 : i32
    return %c0_i32, %c0_i32_0 : i32, i32
  }
  func.func @transform_6(%arg0: i32, %arg1: i32) -> (i32, i32) {
    %c0_i32 = arith.constant 0 : i32
    %c0_i32_0 = arith.constant 0 : i32
    return %arg0, %c0_i32 : i32, i32
  }
}

</mosaic_0001>

<llo_original>
// kernel: tpu_custom_call.1
$region0: #{tpu_custom_call.1}
  #allocation0 [shape = 'u32[]', space=smem, size = 0x4, offset = 0x4, fixed_abs, tag = 'smem constant byte address 0x4 - core index']
  #allocation1 [shape = 'u32[144,128]{1,0:T(1,128)}', space=vmem, size = 0x12000, scoped, tag = 'internal scratch']
  %s0 = inlined_call_operand.hbm [shape: bf16[256,128], index: 0, kind: input, shape index: {}]
  %s1 = inlined_call_operand.hbm [shape: bf16[256,128], index: 1, kind: input, shape index: {}]
  %s2 = inlined_call_operand.hbm [shape: bf16[4,256,256], index: 2, kind: input, shape index: {}]
  %s3 = inlined_call_operand.hbm [shape: bf16[4,128,128], index: 3, kind: input, shape index: {}]
  %s4 = inlined_call_operand.hbm [shape: bf16[128,128], index: 4, kind: input, shape index: {}]
  %s5 = inlined_call_operand.vmem [shape: f32[1,128], index: 5, kind: input, shape index: {}]
  %s6 = inlined_call_operand.hbm [shape: f32[256,128], index: 6, kind: output, shape index: {}]
  %s7 = sld [smem:[#allocation0]]
  $region85: #{tpu_custom_call.1} parent=0
    _
  %s9 = ssub.s32 1, %s7
  %s10 = scalar_select 0, %s9, %s7
  $region1: #{tpu_custom_call.1} parent=0
    #allocation2 [shape = 'u8[65536]{0}', space=vmem, size = 0x10000, scoped, tag = 'input window, operand 0, single buffered']
    #allocation3 [shape = 's32[2]{0}', space=sflag, size = 0x8, scoped, tag = 'scoped memory for tpu_custom_call.1']
    #allocation4 [shape = 's32[2]{0}', space=sflag, size = 0x8, scoped, tag = 'scoped memory for tpu_custom_call.1']
    #allocation5 [shape = 'u8[65536]{0}', space=vmem, size = 0x10000, scoped, tag = 'input window, operand 1, single buffered']
    #allocation6 [shape = 's32[1]{0}', space=sflag, size = 0x4, scoped, tag = 'scoped memory for tpu_custom_call.1']
    #allocation7 [shape = 'u8[262144]{0}', space=vmem, size = 0x40000, scoped, tag = 'input window, operand 2']
    #allocation8 [shape = 'u8[65536]{0}', space=vmem, size = 0x10000, scoped, tag = 'input window, operand 3']
    #allocation9 [shape = 'u8[32768]{0}', space=vmem, size = 0x8000, scoped, tag = 'input window, operand 4, single buffered']
    #allocation10 [shape = 'u8[131072]{0}', space=vmem, size = 0x20000, scoped, tag = 'output window, operand 0, single buffered']
    %11 = vsyncpa [#allocation3], 0
    %12 = vsyncpa [#allocation6], 0
    %13 = vsyncpa [#allocation4], 0
    loop: start=0, step=1, limit=6
    $region2: #{tpu_custom_call.1} parent=1 // loop_pre_header
      _
    $region3: #{tpu_custom_call.1} parent=1 // loop_header
      %s15 = sphi 0, %s19
      %p16 = scmp.ge.s32.totalorder %s15, 6
      %s22 = sphi 0, %s34
      %s23 = sphi 0, %s30
      %s24 = sphi 0, %s22
      %s25 = sphi 0, %s23
      %s26 = sphi 0, %s24
      %s27 = sphi 0, %s25
      %s35 = sphi 0, %s35
      %s37 = sphi 0, %s35
      %s38 = sphi 0, %s37
      %s52 = sphi 0, %s38
      %s58 = sphi 0, %s60
      %s61 = sphi 0, %s58
      %s62 = sphi 0, %s61
      %s78 = sphi 0, %s62
      %s86 = sphi 0, %s88
      %s89 = sphi 0, %s86
      %s90 = sphi 0, %s89
      %s106 = sphi 0, %s90
      %s112 = sphi 0, %s114
      %s115 = sphi 0, %s112
      %s116 = sphi 0, %s115
      %s132 = sphi 0, %s116
      %s136 = sphi 0, %s136
      %s138 = sphi 0, %s136
      %s139 = sphi 0, %s138
      %s153 = sphi 0, %s139
      %s157 = sphi 0, %s157
      %s159 = sphi 0, %s157
      %s160 = sphi 0, %s159
      %s174 = sphi 0, %s160
      %s180 = sphi 0, %s182
      %s183 = sphi 0, %s180
      %s184 = sphi 0, %s183
      %s200 = sphi 0, %s184
    $region4: #{tpu_custom_call.1} parent=1 // loop_header_branch
      %18 = sbr.rel (%p16) target = $region8
    $region5: #{tpu_custom_call.1} parent=1 // loop_body
      %s20 = ssub.s32 %s15, 1
      %s21 = ssub.s32 %s15, 2
      %s28 = sadd.s32 1, %s23
      %p29 = scmp.ge.s32.totalorder %s28, 4
      %s30 = scalar_select %p29, 0, %s28
      %s31 = sadd.s32 1, %s22
      %s32 = scalar_select %p29, %s31, %s22
      %p33 = scmp.ge.s32.totalorder %s32, 1
      %s34 = scalar_select %p33, 0, %s32
      %s36 = sadd.s32 %s35, 1
      %p39 = scmp.eq.s32.totalorder %s15, 3
      %p40 = scmp.ne.s32.totalorder %s35, %s37
      %p41 = scmp.eq.s32.totalorder %s15, 0
      %p42 = por %p40, %p41
      %p43 = scmp.ne.s32.totalorder %s35, %s37
      %p44 = scmp.eq.s32.totalorder %s20, 3
      %p45 = por %p43, %p44
      %p46 = scmp.ne.s32.totalorder %s37, %s38
      %p47 = scmp.eq.s32.totalorder %s20, 0
      %p48 = por %p46, %p47
      %p49 = scmp.ne.s32.totalorder %s37, %s38
      %p50 = scmp.eq.s32.totalorder %s21, 3
      %p51 = por %p49, %p50
      %p53 = scmp.ne.s32.totalorder %s38, %s52
      %p54 = scmp.eq.s32.totalorder %s21, 0
      %p55 = por %p53, %p54
      %s56 = ssub.s32 %s22, %s34
      %p57 = scmp.eq.s32.totalorder %s56, 0
      %s59 = sadd.s32 %s58, 1
      %s60 = scalar_select %p57, %s58, %s59
      %p63 = pneg %p57
      %p64 = scmp.eq.s32.totalorder %s15, 3
      %p65 = por %p63, %p64
      %p66 = scmp.ne.s32.totalorder %s58, %s61
      %p67 = scmp.eq.s32.totalorder %s15, 0
      %p68 = por %p66, %p67
      %p69 = scmp.ne.s32.totalorder %s58, %s61
      %p70 = scmp.eq.s32.totalorder %s20, 3
      %p71 = por %p69, %p70
      %p72 = scmp.ne.s32.totalorder %s61, %s62
      %p73 = scmp.eq.s32.totalorder %s20, 0
      %p74 = por %p72, %p73
      %p75 = scmp.ne.s32.totalorder %s61, %s62
      %p76 = scmp.eq.s32.totalorder %s21, 3
      %p77 = por %p75, %p76
      %p79 = scmp.ne.s32.totalorder %s62, %s78
      %p80 = scmp.eq.s32.totalorder %s21, 0
      %p81 = por %p79, %p80
      %s82 = ssub.s32 %s23, %s30
      %s83 = ssub.s32 %s22, %s34
      %s84 = sor.u32 %s82, %s83
      %p85 = scmp.eq.s32.totalorder %s84, 0
      %s87 = sadd.s32 %s86, 1
      %s88 = scalar_select %p85, %s86, %s87
      %p91 = pneg %p85
      %p92 = scmp.eq.s32.totalorder %s15, 3
      %p93 = por %p91, %p92
      %p94 = scmp.ne.s32.totalorder %s86, %s89
      %p95 = scmp.eq.s32.totalorder %s15, 0
      %p96 = por %p94, %p95
      %p97 = scmp.ne.s32.totalorder %s86, %s89
      %p98 = scmp.eq.s32.totalorder %s20, 3
      %p99 = por %p97, %p98
      %p100 = scmp.ne.s32.totalorder %s89, %s90
      %p101 = scmp.eq.s32.totalorder %s20, 0
      %p102 = por %p100, %p101
      %p103 = scmp.ne.s32.totalorder %s89, %s90
      %p104 = scmp.eq.s32.totalorder %s21, 3
      %p105 = por %p103, %p104
      %p107 = scmp.ne.s32.totalorder %s90, %s106
      %p108 = scmp.eq.s32.totalorder %s21, 0
      %p109 = por %p107, %p108
      %s110 = ssub.s32 %s23, %s30
      %p111 = scmp.eq.s32.totalorder %s110, 0
      %s113 = sadd.s32 %s112, 1
      %s114 = scalar_select %p111, %s112, %s113
      %p117 = pneg %p111
      %p118 = scmp.eq.s32.totalorder %s15, 3
      %p119 = por %p117, %p118
      %p120 = scmp.ne.s32.totalorder %s112, %s115
      %p121 = scmp.eq.s32.totalorder %s15, 0
      %p122 = por %p120, %p121
      %p123 = scmp.ne.s32.totalorder %s112, %s115
      %p124 = scmp.eq.s32.totalorder %s20, 3
      %p125 = por %p123, %p124
      %p126 = scmp.ne.s32.totalorder %s115, %s116
      %p127 = scmp.eq.s32.totalorder %s20, 0
      %p128 = por %p126, %p127
      %p129 = scmp.ne.s32.totalorder %s115, %s116
      %p130 = scmp.eq.s32.totalorder %s21, 3
      %p131 = por %p129, %p130
      %p133 = scmp.ne.s32.totalorder %s116, %s132
      %p134 = scmp.eq.s32.totalorder %s21, 0
      %p135 = por %p133, %p134
      %s137 = sadd.s32 %s136, 1
      %p140 = scmp.eq.s32.totalorder %s15, 3
      %p141 = scmp.ne.s32.totalorder %s136, %s138
      %p142 = scmp.eq.s32.totalorder %s15, 0
      %p143 = por %p141, %p142
      %p144 = scmp.ne.s32.totalorder %s136, %s138
      %p145 = scmp.eq.s32.totalorder %s20, 3
      %p146 = por %p144, %p145
      %p147 = scmp.ne.s32.totalorder %s138, %s139
      %p148 = scmp.eq.s32.totalorder %s20, 0
      %p149 = por %p147, %p148
      %p150 = scmp.ne.s32.totalorder %s138, %s139
      %p151 = scmp.eq.s32.totalorder %s21, 3
      %p152 = por %p150, %p151
      %p154 = scmp.ne.s32.totalorder %s139, %s153
      %p155 = scmp.eq.s32.totalorder %s21, 0
      %p156 = por %p154, %p155
      %s158 = sadd.s32 %s157, 1
      %p161 = scmp.eq.s32.totalorder %s15, 3
      %p162 = scmp.ne.s32.totalorder %s157, %s159
      %p163 = scmp.eq.s32.totalorder %s15, 0
      %p164 = por %p162, %p163
      %p165 = scmp.ne.s32.totalorder %s157, %s159
      %p166 = scmp.eq.s32.totalorder %s20, 3
      %p167 = por %p165, %p166
      %p168 = scmp.ne.s32.totalorder %s159, %s160
      %p169 = scmp.eq.s32.totalorder %s20, 0
      %p170 = por %p168, %p169
      %p171 = scmp.ne.s32.totalorder %s159, %s160
      %p172 = scmp.eq.s32.totalorder %s21, 3
      %p173 = por %p171, %p172
      %p175 = scmp.ne.s32.totalorder %s160, %s174
      %p176 = scmp.eq.s32.totalorder %s21, 0
      %p177 = por %p175, %p176
      %s178 = ssub.s32 %s22, %s34
      %p179 = scmp.eq.s32.totalorder %s178, 0
      %s181 = sadd.s32 %s180, 1
      %s182 = scalar_select %p179, %s180, %s181
      %p185 = pneg %p179
      %p186 = scmp.eq.s32.totalorder %s15, 3
      %p187 = por %p185, %p186
      %p188 = scmp.ne.s32.totalorder %s180, %s183
      %p189 = scmp.eq.s32.totalorder %s15, 0
      %p190 = por %p188, %p189
      %p191 = scmp.ne.s32.totalorder %s180, %s183
      %p192 = scmp.eq.s32.totalorder %s20, 3
      %p193 = por %p191, %p192
      %p194 = scmp.ne.s32.totalorder %s183, %s184
      %p195 = scmp.eq.s32.totalorder %s20, 0
      %p196 = por %p194, %p195
      %p197 = scmp.ne.s32.totalorder %s183, %s184
      %p198 = scmp.eq.s32.totalorder %s21, 3
      %p199 = por %p197, %p198
      %p201 = scmp.ne.s32.totalorder %s184, %s200
      %p202 = scmp.eq.s32.totalorder %s21, 0
      %p203 = por %p201, %p202
      %p204 = scmp.le.s32.totalorder 1, %s15
      %p205 = scmp.lt.s32.totalorder %s15, 5
      %p206 = pnand %p204, %p205
      %p207 = pneg %p206
      // Predicated region
      $region9: #{tpu_custom_call.1} parent=5 // pred_check
        _
      $region10: #{tpu_custom_call.1} parent=5 // pred_check_branch
        %209 = sbr.rel (%p206) target = $region12
      $region11: #{tpu_custom_call.1} parent=5 // pred_region
        %s210 = ssub.s32 %s15, 1
        // Predicated region
        $region13: #{tpu_custom_call.1} parent=11 // pred_check
          %p211 = pneg %p48
        $region14: #{tpu_custom_call.1} parent=11 // pred_check_branch
          %213 = sbr.rel (%p211) target = $region16
        $region15: #{tpu_custom_call.1} parent=11 // pred_region
          %s215 = ssub.s32 2048, 2048
          %216 = vsyncadd [#allocation3], %s215
          %s217 = sshll.u32 [#allocation2], 4
          %s218 = int_to_ptr.vmem [resolvable:$true] %s217
          %223 = dma.hbm_to_vmem [thread:$0]  %s0, 2048, %s218, [#allocation3], 64, 64, 4
        $region16: #{tpu_custom_call.1} parent=11 // pred_fallthru
          _
        // Predicated region
        $region17: #{tpu_custom_call.1} parent=11 // pred_check
          %p224 = pneg %p74
        $region18: #{tpu_custom_call.1} parent=11 // pred_check_branch
          %226 = sbr.rel (%p224) target = $region20
        $region19: #{tpu_custom_call.1} parent=11 // pred_region
          %s227 = smul.u32 32, %s24
          %s229 = ssub.s32 2048, 2048
          %230 = vsyncadd [#allocation6], %s229
          %s231 = smul.addr %s227, 64
          %s232 = scalar_lea.hbm %s1, %s231
          %s233 = sshll.u32 [#allocation5], 4
          %s234 = int_to_ptr.vmem [resolvable:$true] %s233
          %239 = dma.hbm_to_vmem [thread:$0]  %s232, 2048, %s234, [#allocation6], 64, 64, 4
        $region20: #{tpu_custom_call.1} parent=11 // pred_fallthru
          _
        // Predicated region
        $region21: #{tpu_custom_call.1} parent=11 // pred_check
          %p240 = pneg %p149
        $region22: #{tpu_custom_call.1} parent=11 // pred_check_branch
          %242 = sbr.rel (%p240) target = $region24
        $region23: #{tpu_custom_call.1} parent=11 // pred_region
          %s244 = ssub.s32 1024, 1024
          %245 = vsyncadd [#allocation6], %s244
          %s246 = sshll.u32 [#allocation9], 4
          %s247 = int_to_ptr.vmem [resolvable:$true] %s246
          %252 = dma.hbm_to_vmem [thread:$0]  %s4, 1024, %s247, [#allocation6], 64, 64, 4
        $region24: #{tpu_custom_call.1} parent=11 // pred_fallthru
          _
        // Predicated region
        $region25: #{tpu_custom_call.1} parent=11 // pred_check
          %p253 = pneg %p170
        $region26: #{tpu_custom_call.1} parent=11 // pred_check_branch
          %255 = sbr.rel (%p253) target = $region28
        $region27: #{tpu_custom_call.1} parent=11 // pred_region
          _
        $region28: #{tpu_custom_call.1} parent=11 // pred_fallthru
          _
      $region12: #{tpu_custom_call.1} parent=5 // pred_fallthru
        _
      %p256 = scmp.lt.s32.totalorder %s15, 4
      // Predicated region
      $region29: #{tpu_custom_call.1} parent=5 // pred_check
        %p257 = pneg %p256
      $region30: #{tpu_custom_call.1} parent=5 // pred_check_branch
        %259 = sbr.rel (%p257) target = $region32
      $region31: #{tpu_custom_call.1} parent=5 // pred_region
        // Predicated region
        $region33: #{tpu_custom_call.1} parent=31 // pred_check
          %p260 = pneg %p96
        $region34: #{tpu_custom_call.1} parent=31 // pred_check_branch
          %262 = sbr.rel (%p260) target = $region36
        $region35: #{tpu_custom_call.1} parent=31 // pred_region
          %s263 = sand.u32 %s15, 1
          %s264 = scalar_lea.sflag [#allocation3], %s263
          %s265 = sand.u32 %s86, 1
          %s266 = smul.addr %s265, 256
          %s267 = scalar_lea.vmem [#allocation7], %s266
          %s268 = smul.u32 32, %s22
          %s270 = ssub.s32 4096, 4096
          %271 = vsyncadd %s264, %s270
          %s272 = smul.addr %s268, 2
          %s273 = smul.addr %s23, 64
          %s274 = sadd.s32 %s272, %s273
          %s275 = smul.addr %s274, 64
          %s276 = scalar_lea.hbm %s2, %s275
          %s277 = sshll.u32 %s267, 4
          %s278 = int_to_ptr.vmem [resolvable:$true] %s277
          %283 = dma.hbm_to_vmem [thread:$0]  %s276, 4096, %s278, %s264, 128, 128, 8
        $region36: #{tpu_custom_call.1} parent=31 // pred_fallthru
          _
        // Predicated region
        $region37: #{tpu_custom_call.1} parent=31 // pred_check
          %p284 = pneg %p122
        $region38: #{tpu_custom_call.1} parent=31 // pred_check_branch
          %286 = sbr.rel (%p284) target = $region40
        $region39: #{tpu_custom_call.1} parent=31 // pred_region
          %s287 = sand.u32 %s15, 1
          %s288 = scalar_lea.sflag [#allocation3], %s287
          %s289 = sand.u32 %s112, 1
          %s290 = smul.addr %s289, 64
          %s291 = scalar_lea.vmem [#allocation8], %s290
          %s293 = ssub.s32 1024, 1024
          %294 = vsyncadd %s288, %s293
          %s295 = smul.addr %s23, 16
          %s296 = smul.addr %s295, 64
          %s297 = scalar_lea.hbm %s3, %s296
          %s298 = sshll.u32 %s291, 4
          %s299 = int_to_ptr.vmem [resolvable:$true] %s298
          %304 = dma.hbm_to_vmem [thread:$0]  %s297, 1024, %s299, %s288, 64, 64, 4
        $region40: #{tpu_custom_call.1} parent=31 // pred_fallthru
          _
      $region32: #{tpu_custom_call.1} parent=5 // pred_fallthru
        _
      %p305 = scmp.le.s32.totalorder 1, %s15
      %p306 = scmp.lt.s32.totalorder %s15, 5
      %p307 = pnand %p305, %p306
      %p308 = pneg %p307
      // Predicated region
      $region41: #{tpu_custom_call.1} parent=5 // pred_check
        _
      $region42: #{tpu_custom_call.1} parent=5 // pred_check_branch
        %310 = sbr.rel (%p307) target = $region44
      $region43: #{tpu_custom_call.1} parent=5 // pred_region
        %s311 = ssub.s32 %s15, 1
        // Predicated region
        $region45: #{tpu_custom_call.1} parent=43 // pred_check
          %p312 = pneg %p48
        $region46: #{tpu_custom_call.1} parent=43 // pred_check_branch
          %314 = sbr.rel (%p312) target = $region48
        $region47: #{tpu_custom_call.1} parent=43 // pred_region
          %315 = dma.done [#allocation3], 2048
        $region48: #{tpu_custom_call.1} parent=43 // pred_fallthru
          _
        // Predicated region
        $region49: #{tpu_custom_call.1} parent=43 // pred_check
          %p316 = pneg %p74
        $region50: #{tpu_custom_call.1} parent=43 // pred_check_branch
          %318 = sbr.rel (%p316) target = $region52
        $region51: #{tpu_custom_call.1} parent=43 // pred_region
          %319 = dma.done [#allocation6], 2048
        $region52: #{tpu_custom_call.1} parent=43 // pred_fallthru
          _
        %s320 = sand.u32 %s20, 1
        %s321 = scalar_lea.sflag [#allocation3], %s320
        %s322 = sand.u32 %s89, 1
        %s323 = smul.addr %s322, 256
        %s324 = scalar_lea.vmem [#allocation7], %s323
        // Predicated region
        $region53: #{tpu_custom_call.1} parent=43 // pred_check
          %p325 = pneg %p102
        $region54: #{tpu_custom_call.1} parent=43 // pred_check_branch
          %327 = sbr.rel (%p325) target = $region56
        $region55: #{tpu_custom_call.1} parent=43 // pred_region
          %328 = dma.done %s321, 4096
        $region56: #{tpu_custom_call.1} parent=43 // pred_fallthru
          _
        %s329 = sand.u32 %s20, 1
        %s330 = scalar_lea.sflag [#allocation3], %s329
        %s331 = sand.u32 %s115, 1
        %s332 = smul.addr %s331, 64
        %s333 = scalar_lea.vmem [#allocation8], %s332
        // Predicated region
        $region57: #{tpu_custom_call.1} parent=43 // pred_check
          %p334 = pneg %p128
        $region58: #{tpu_custom_call.1} parent=43 // pred_check_branch
          %336 = sbr.rel (%p334) target = $region60
        $region59: #{tpu_custom_call.1} parent=43 // pred_region
          %337 = dma.done %s330, 1024
        $region60: #{tpu_custom_call.1} parent=43 // pred_fallthru
          _
        // Predicated region
        $region61: #{tpu_custom_call.1} parent=43 // pred_check
          %p338 = pneg %p149
        $region62: #{tpu_custom_call.1} parent=43 // pred_check_branch
          %340 = sbr.rel (%p338) target = $region64
        $region63: #{tpu_custom_call.1} parent=43 // pred_region
          %341 = dma.done [#allocation6], 1024
        $region64: #{tpu_custom_call.1} parent=43 // pred_fallthru
          _
        %p342 = pneg %p48
        %p343 = pneg %p45
        %p344 = pneg %p74
        %p345 = pneg %p71
        %s346 = sand.u32 %s20, 1
        %s347 = scalar_lea.sflag [#allocation3], %s346
        %s348 = sand.u32 %s89, 1
        %s349 = smul.addr %s348, 256
        %s350 = scalar_lea.vmem [#allocation7], %s349
        %p351 = pneg %p102
        %p352 = pneg %p99
        %s353 = sand.u32 %s20, 1
        %s354 = scalar_lea.sflag [#allocation3], %s353
        %s355 = sand.u32 %s115, 1
        %s356 = smul.addr %s355, 64
        %s357 = scalar_lea.vmem [#allocation8], %s356
        %p358 = pneg %p128
        %p359 = pneg %p125
        %p360 = pneg %p149
        %p361 = pneg %p146
        %p362 = pneg %p170
        %p363 = pneg %p167
        %p364 = pneg %p196
        %p365 = pneg %p193
        %s366 = smul.u32 32, %s24
        %s367 = smul.u32 32, %s24
        %s368 = smul.u32 32, %s24
        %p370 = scmp.eq.s32.totalorder %s25, 0
        // Predicated region
        $region65: #{tpu_custom_call.1} parent=43 // pred_check
          %p371 = pneg %p370
        $region66: #{tpu_custom_call.1} parent=43 // pred_check_branch
          %373 = sbr.rel (%p371) target = $region68
        $region67: #{tpu_custom_call.1} parent=43 // pred_region
          %v374 = vld [vmem:[#allocation5] sm:$0xf]
          %v375 = vld [vmem:[#allocation5 + $0x4] sm:$0xf]
          %v376 = vld [vmem:[#allocation5 + $0x8] sm:$0xf]
          %v377 = vld [vmem:[#allocation5 + $0xc] sm:$0xf]
          %v378 = vld [vmem:[#allocation5 + $0x10] sm:$0xf]
          %v379 = vld [vmem:[#allocation5 + $0x14] sm:$0xf]
          %v380 = vld [vmem:[#allocation5 + $0x18] sm:$0xf]
          %v381 = vld [vmem:[#allocation5 + $0x1c] sm:$0xf]
          %v382 = vld [vmem:[#allocation5 + $0x20] sm:$0xf]
          %v383 = vld [vmem:[#allocation5 + $0x24] sm:$0xf]
          %v384 = vld [vmem:[#allocation5 + $0x28] sm:$0xf]
          %v385 = vld [vmem:[#allocation5 + $0x2c] sm:$0xf]
          %v386 = vld [vmem:[#allocation5 + $0x30] sm:$0xf]
          %v387 = vld [vmem:[#allocation5 + $0x34] sm:$0xf]
          %v388 = vld [vmem:[#allocation5 + $0x38] sm:$0xf]
          %v389 = vld [vmem:[#allocation5 + $0x3c] sm:$0xf]
          %v390 = vld [vmem:[#allocation5 + $0x40] sm:$0xf]
          %v391 = vld [vmem:[#allocation5 + $0x44] sm:$0xf]
          %v392 = vld [vmem:[#allocation5 + $0x48] sm:$0xf]
          %v393 = vld [vmem:[#allocation5 + $0x4c] sm:$0xf]
          %v394 = vld [vmem:[#allocation5 + $0x50] sm:$0xf]
          %v395 = vld [vmem:[#allocation5 + $0x54] sm:$0xf]
          %v396 = vld [vmem:[#allocation5 + $0x58] sm:$0xf]
          %v397 = vld [vmem:[#allocation5 + $0x5c] sm:$0xf]
          %v398 = vld [vmem:[#allocation5 + $0x60] sm:$0xf]
          %v399 = vld [vmem:[#allocation5 + $0x64] sm:$0xf]
          %v400 = vld [vmem:[#allocation5 + $0x68] sm:$0xf]
          %v401 = vld [vmem:[#allocation5 + $0x6c] sm:$0xf]
          %v402 = vld [vmem:[#allocation5 + $0x70] sm:$0xf]
          %v403 = vld [vmem:[#allocation5 + $0x74] sm:$0xf]
          %v404 = vld [vmem:[#allocation5 + $0x78] sm:$0xf]
          %v405 = vld [vmem:[#allocation5 + $0x7c] sm:$0xf]
          %v406 = vld [vmem:[#allocation9] sm:$0xf]
          %v407 = vld [vmem:[#allocation9 + $0x4] sm:$0xf]
          %v408 = vld [vmem:[#allocation9 + $0x8] sm:$0xf]
          %v409 = vld [vmem:[#allocation9 + $0xc] sm:$0xf]
          %v410 = vld [vmem:[#allocation9 + $0x10] sm:$0xf]
          %v411 = vld [vmem:[#allocation9 + $0x14] sm:$0xf]
          %v412 = vld [vmem:[#allocation9 + $0x18] sm:$0xf]
          %v413 = vld [vmem:[#allocation9 + $0x1c] sm:$0xf]
          %v414 = vld [vmem:[#allocation9 + $0x20] sm:$0xf]
          %v415 = vld [vmem:[#allocation9 + $0x24] sm:$0xf]
          %v416 = vld [vmem:[#allocation9 + $0x28] sm:$0xf]
          %v417 = vld [vmem:[#allocation9 + $0x2c] sm:$0xf]
          %v418 = vld [vmem:[#allocation9 + $0x30] sm:$0xf]
          %v419 = vld [vmem:[#allocation9 + $0x34] sm:$0xf]
          %v420 = vld [vmem:[#allocation9 + $0x38] sm:$0xf]
          %v421 = vld [vmem:[#allocation9 + $0x3c] sm:$0xf]
          %v422 = vld [vmem:[%s5] sm:$0x1]
          %v424 = vlaneseq
          %v425 = vshrl.u32 %v424, 7
          %v426 = vsub.s32 0, %v425
          %v427 = vrot.slane %v422, %v426
          %v461 = vunpack.c.l.b16 %v374
          %v462 = vunpack.c.l.b16 %v375
          %v463 = vunpack.c.l.b16 %v376
          %v464 = vunpack.c.l.b16 %v377
          %v465 = vunpack.c.l.b16 %v378
          %v466 = vunpack.c.l.b16 %v379
          %v467 = vunpack.c.l.b16 %v380
          %v468 = vunpack.c.l.b16 %v381
          %v469 = vunpack.c.l.b16 %v382
          %v470 = vunpack.c.l.b16 %v383
          %v471 = vunpack.c.l.b16 %v384
          %v472 = vunpack.c.l.b16 %v385
          %v473 = vunpack.c.l.b16 %v386
          %v474 = vunpack.c.l.b16 %v387
          %v475 = vunpack.c.l.b16 %v388
          %v476 = vunpack.c.l.b16 %v389
          %v477 = vunpack.c.l.b16 %v390
          %v478 = vunpack.c.l.b16 %v391
          %v479 = vunpack.c.l.b16 %v392
          %v480 = vunpack.c.l.b16 %v393
          %v481 = vunpack.c.l.b16 %v394
          %v482 = vunpack.c.l.b16 %v395
          %v483 = vunpack.c.l.b16 %v396
          %v484 = vunpack.c.l.b16 %v397
          %v485 = vunpack.c.l.b16 %v398
          %v486 = vunpack.c.l.b16 %v399
          %v487 = vunpack.c.l.b16 %v400
          %v488 = vunpack.c.l.b16 %v401
          %v489 = vunpack.c.l.b16 %v402
          %v490 = vunpack.c.l.b16 %v403
          %v491 = vunpack.c.l.b16 %v404
          %v492 = vunpack.c.l.b16 %v405
          %v493 = vpack.c.b16 %v462, %v461
          %v494 = vpack.c.b16 %v464, %v463
          %v495 = vpack.c.b16 %v466, %v465
          %v496 = vpack.c.b16 %v468, %v467
          %v497 = vpack.c.b16 %v470, %v469
          %v498 = vpack.c.b16 %v472, %v471
          %v499 = vpack.c.b16 %v474, %v473
          %v500 = vpack.c.b16 %v476, %v475
          %v501 = vpack.c.b16 %v478, %v477
          %v502 = vpack.c.b16 %v480, %v479
          %v503 = vpack.c.b16 %v482, %v481
          %v504 = vpack.c.b16 %v484, %v483
          %v505 = vpack.c.b16 %v486, %v485
          %v506 = vpack.c.b16 %v488, %v487
          %v507 = vpack.c.b16 %v490, %v489
          %v508 = vpack.c.b16 %v492, %v491
          %v541 = vunpack.c.l.b16 %v406
          %v542 = vunpack.c.l.b16 %v407
          %v543 = vunpack.c.l.b16 %v408
          %v544 = vunpack.c.l.b16 %v409
          %v545 = vunpack.c.l.b16 %v410
          %v546 = vunpack.c.l.b16 %v411
          %v547 = vunpack.c.l.b16 %v412
          %v548 = vunpack.c.l.b16 %v413
          %v549 = vunpack.c.l.b16 %v414
          %v550 = vunpack.c.l.b16 %v415
          %v551 = vunpack.c.l.b16 %v416
          %v552 = vunpack.c.l.b16 %v417
          %v553 = vunpack.c.l.b16 %v418
          %v554 = vunpack.c.l.b16 %v419
          %v555 = vunpack.c.l.b16 %v420
          %v556 = vunpack.c.l.b16 %v421
          %v557 = vpack.c.b16 %v542, %v541
          %v558 = vpack.c.b16 %v544, %v543
          %v559 = vpack.c.b16 %v546, %v545
          %v560 = vpack.c.b16 %v548, %v547
          %v561 = vpack.c.b16 %v550, %v549
          %v562 = vpack.c.b16 %v552, %v551
          %v563 = vpack.c.b16 %v554, %v553
          %v564 = vpack.c.b16 %v556, %v555
          %573 = vmatprep.subr.bf16.mxu0 0
          %574 = vmatpush1.bf16.msra.mxu0 %v564
          %575 = vmatprep.subr.bf16.mxu0 0
          %576 = vmatpush1.bf16.msra.mxu0 %v563
          %577 = vmatprep.subr.bf16.mxu0 0
          %578 = vmatpush1.bf16.msra.mxu0 %v562
          %579 = vmatprep.subr.bf16.mxu0 0
          %580 = vmatpush1.bf16.msra.mxu0 %v561
          %581 = vmatprep.subr.bf16.mxu0 0
          %582 = vmatpush1.bf16.msra.mxu0 %v560
          %583 = vmatprep.subr.bf16.mxu0 0
          %584 = vmatpush1.bf16.msra.mxu0 %v559
          %585 = vmatprep.subr.bf16.mxu0 0
          %586 = vmatpush1.bf16.msra.mxu0 %v558
          %587 = vmatprep.subr.bf16.mxu0 0
          %588 = vmatpush1.bf16.msra.mxu0 %v557
          %589 = vmatprep.subr.bf16.mxu0 0
          %590 = vmatpush2.bf16.msra.mxu0 0
          %591 = vmatprep.subr.bf16.mxu0 0
          %592 = vmatpush2.bf16.msra.mxu0 0
          %593 = vmatprep.subr.bf16.mxu0 0
          %594 = vmatpush2.bf16.msra.mxu0 0
          %595 = vmatprep.subr.bf16.mxu0 0
          %596 = vmatpush2.bf16.msra.mxu0 0
          %597 = vmatprep.subr.bf16.mxu0 0
          %598 = vmatpush2.bf16.msra.mxu0 0
          %599 = vmatprep.subr.bf16.mxu0 0
          %600 = vmatpush2.bf16.msra.mxu0 0
          %601 = vmatprep.subr.bf16.mxu0 0
          %602 = vmatpush2.bf16.msra.mxu0 0
          %603 = vmatprep.subr.bf16.mxu0 0
          %604 = vmatpush2.bf16.msra.mxu0 0
          %605 = vmatprep.mubr.bf16.mxu0 0
          %606 = vmatmul.mubr.bf16.gmra.mxu0 %v493
          %v607 = vpop.f32.mrf.mxu0
          %v608 = vadd.f32 %v427, %v607
          %v609 = vpop.f32.mrf.mxu0
          %v610 = vpop.f32.mrf.mxu0
          %v611 = vadd.f32 %v427, %v610
          %v612 = vpop.f32.mrf.mxu0
          %613 = vmatprep.mubr.bf16.mxu0 0
          %614 = vmatmul.mubr.bf16.gmra.mxu0 %v494
          %v615 = vpop.f32.mrf.mxu0
          %v616 = vadd.f32 %v427, %v615
          %v617 = vpop.f32.mrf.mxu0
          %v618 = vpop.f32.mrf.mxu0
          %v619 = vadd.f32 %v427, %v618
          %v620 = vpop.f32.mrf.mxu0
          %621 = vmatprep.mubr.bf16.mxu0 0
          %622 = vmatmul.mubr.bf16.gmra.mxu0 %v495
          %v623 = vpop.f32.mrf.mxu0
          %v624 = vadd.f32 %v427, %v623
          %v625 = vpop.f32.mrf.mxu0
          %v626 = vpop.f32.mrf.mxu0
          %v627 = vadd.f32 %v427, %v626
          %v628 = vpop.f32.mrf.mxu0
          %629 = vmatprep.mubr.bf16.mxu0 0
          %630 = vmatmul.mubr.bf16.gmra.mxu0 %v496
          %v631 = vpop.f32.mrf.mxu0
          %v632 = vadd.f32 %v427, %v631
          %v633 = vpop.f32.mrf.mxu0
          %v634 = vpop.f32.mrf.mxu0
          %v635 = vadd.f32 %v427, %v634
          %v636 = vpop.f32.mrf.mxu0
          %637 = vmatprep.mubr.bf16.mxu0 0
          %638 = vmatmul.mubr.bf16.gmra.mxu0 %v497
          %v639 = vpop.f32.mrf.mxu0
          %v640 = vadd.f32 %v427, %v639
          %v641 = vpop.f32.mrf.mxu0
          %v642 = vpop.f32.mrf.mxu0
          %v643 = vadd.f32 %v427, %v642
          %v644 = vpop.f32.mrf.mxu0
          %645 = vmatprep.mubr.bf16.mxu0 0
          %646 = vmatmul.mubr.bf16.gmra.mxu0 %v498
          %v647 = vpop.f32.mrf.mxu0
          %v648 = vadd.f32 %v427, %v647
          %v649 = vpop.f32.mrf.mxu0
          %v650 = vpop.f32.mrf.mxu0
          %v651 = vadd.f32 %v427, %v650
          %v652 = vpop.f32.mrf.mxu0
          %653 = vmatprep.mubr.bf16.mxu0 0
          %654 = vmatmul.mubr.bf16.gmra.mxu0 %v499
          %v655 = vpop.f32.mrf.mxu0
          %v656 = vadd.f32 %v427, %v655
          %v657 = vpop.f32.mrf.mxu0
          %v658 = vpop.f32.mrf.mxu0
          %v659 = vadd.f32 %v427, %v658
          %v660 = vpop.f32.mrf.mxu0
          %661 = vmatprep.mubr.bf16.mxu0 0
          %662 = vmatmul.mubr.bf16.gmra.mxu0 %v500
          %v663 = vpop.f32.mrf.mxu0
          %v664 = vadd.f32 %v427, %v663
          %v665 = vpop.f32.mrf.mxu0
          %v666 = vpop.f32.mrf.mxu0
          %v667 = vadd.f32 %v427, %v666
          %v668 = vpop.f32.mrf.mxu0
          %669 = vmatprep.mubr.bf16.mxu0 0
          %670 = vmatmul.mubr.bf16.gmra.mxu0 %v501
          %v671 = vpop.f32.mrf.mxu0
          %v672 = vadd.f32 %v427, %v671
          %v673 = vpop.f32.mrf.mxu0
          %v674 = vpop.f32.mrf.mxu0
          %v675 = vadd.f32 %v427, %v674
          %v676 = vpop.f32.mrf.mxu0
          %677 = vmatprep.mubr.bf16.mxu0 0
          %678 = vmatmul.mubr.bf16.gmra.mxu0 %v502
          %v679 = vpop.f32.mrf.mxu0
          %v680 = vadd.f32 %v427, %v679
          %v681 = vpop.f32.mrf.mxu0
          %v682 = vpop.f32.mrf.mxu0
          %v683 = vadd.f32 %v427, %v682
          %v684 = vpop.f32.mrf.mxu0
          %685 = vmatprep.mubr.bf16.mxu0 0
          %686 = vmatmul.mubr.bf16.gmra.mxu0 %v503
          %v687 = vpop.f32.mrf.mxu0
          %v688 = vadd.f32 %v427, %v687
          %v689 = vpop.f32.mrf.mxu0
          %v690 = vpop.f32.mrf.mxu0
          %v691 = vadd.f32 %v427, %v690
          %v692 = vpop.f32.mrf.mxu0
          %693 = vmatprep.mubr.bf16.mxu0 0
          %694 = vmatmul.mubr.bf16.gmra.mxu0 %v504
          %v695 = vpop.f32.mrf.mxu0
          %v696 = vadd.f32 %v427, %v695
          %v697 = vpop.f32.mrf.mxu0
          %v698 = vpop.f32.mrf.mxu0
          %v699 = vadd.f32 %v427, %v698
          %v700 = vpop.f32.mrf.mxu0
          %701 = vmatprep.mubr.bf16.mxu0 0
          %702 = vmatmul.mubr.bf16.gmra.mxu0 %v505
          %v703 = vpop.f32.mrf.mxu0
          %v704 = vadd.f32 %v427, %v703
          %v705 = vpop.f32.mrf.mxu0
          %v706 = vpop.f32.mrf.mxu0
          %v707 = vadd.f32 %v427, %v706
          %v708 = vpop.f32.mrf.mxu0
          %709 = vmatprep.mubr.bf16.mxu0 0
          %710 = vmatmul.mubr.bf16.gmra.mxu0 %v506
          %v711 = vpop.f32.mrf.mxu0
          %v712 = vadd.f32 %v427, %v711
          %v713 = vpop.f32.mrf.mxu0
          %v714 = vpop.f32.mrf.mxu0
          %v715 = vadd.f32 %v427, %v714
          %v716 = vpop.f32.mrf.mxu0
          %717 = vmatprep.mubr.bf16.mxu0 0
          %718 = vmatmul.mubr.bf16.gmra.mxu0 %v507
          %v719 = vpop.f32.mrf.mxu0
          %v720 = vadd.f32 %v427, %v719
          %v721 = vpop.f32.mrf.mxu0
          %v722 = vpop.f32.mrf.mxu0
          %v723 = vadd.f32 %v427, %v722
          %v724 = vpop.f32.mrf.mxu0
          %725 = vmatprep.mubr.bf16.mxu0 0
          %726 = vmatmul.mubr.bf16.gmra.mxu0 %v508
          %v727 = vpop.f32.mrf.mxu0
          %v728 = vadd.f32 %v427, %v727
          %v729 = vpop.f32.mrf.mxu0
          %v730 = vpop.f32.mrf.mxu0
          %v731 = vadd.f32 %v427, %v730
          %v732 = vpop.f32.mrf.mxu0
          %733 = vdwg.mxu0
          %734 = vst [vmem:[#allocation10] sm:$0xff] %v608
          %735 = vst [vmem:[#allocation10 + $0x8] sm:$0xff] %v611
          %736 = vst [vmem:[#allocation10 + $0x10] sm:$0xff] %v616
          %737 = vst [vmem:[#allocation10 + $0x18] sm:$0xff] %v619
          %738 = vst [vmem:[#allocation10 + $0x20] sm:$0xff] %v624
          %739 = vst [vmem:[#allocation10 + $0x28] sm:$0xff] %v627
          %740 = vst [vmem:[#allocation10 + $0x30] sm:$0xff] %v632
          %741 = vst [vmem:[#allocation10 + $0x38] sm:$0xff] %v635
          %742 = vst [vmem:[#allocation10 + $0x40] sm:$0xff] %v640
          %743 = vst [vmem:[#allocation10 + $0x48] sm:$0xff] %v643
          %744 = vst [vmem:[#allocation10 + $0x50] sm:$0xff] %v648
          %745 = vst [vmem:[#allocation10 + $0x58] sm:$0xff] %v651
          %746 = vst [vmem:[#allocation10 + $0x60] sm:$0xff] %v656
          %747 = vst [vmem:[#allocation10 + $0x68] sm:$0xff] %v659
          %748 = vst [vmem:[#allocation10 + $0x70] sm:$0xff] %v664
          %749 = vst [vmem:[#allocation10 + $0x78] sm:$0xff] %v667
          %750 = vst [vmem:[#allocation10 + $0x80] sm:$0xff] %v672
          %751 = vst [vmem:[#allocation10 + $0x88] sm:$0xff] %v675
          %752 = vst [vmem:[#allocation10 + $0x90] sm:$0xff] %v680
          %753 = vst [vmem:[#allocation10 + $0x98] sm:$0xff] %v683
          %754 = vst [vmem:[#allocation10 + $0xa0] sm:$0xff] %v688
          %755 = vst [vmem:[#allocation10 + $0xa8] sm:$0xff] %v691
          %756 = vst [vmem:[#allocation10 + $0xb0] sm:$0xff] %v696
          %757 = vst [vmem:[#allocation10 + $0xb8] sm:$0xff] %v699
          %758 = vst [vmem:[#allocation10 + $0xc0] sm:$0xff] %v704
          %759 = vst [vmem:[#allocation10 + $0xc8] sm:$0xff] %v707
          %760 = vst [vmem:[#allocation10 + $0xd0] sm:$0xff] %v712
          %761 = vst [vmem:[#allocation10 + $0xd8] sm:$0xff] %v715
          %762 = vst [vmem:[#allocation10 + $0xe0] sm:$0xff] %v720
          %763 = vst [vmem:[#allocation10 + $0xe8] sm:$0xff] %v723
          %764 = vst [vmem:[#allocation10 + $0xf0] sm:$0xff] %v728
          %765 = vst [vmem:[#allocation10 + $0xf8] sm:$0xff] %v731
        $region68: #{tpu_custom_call.1} parent=43 // pred_fallthru
          _
        %v766 = vld [vmem:[#allocation2] sm:$0xf]
        %v767 = vld [vmem:[#allocation2 + $0x4] sm:$0xf]
        %v768 = vld [vmem:[#allocation2 + $0x8] sm:$0xf]
        %v769 = vld [vmem:[#allocation2 + $0xc] sm:$0xf]
        %v770 = vld [vmem:[#allocation2 + $0x10] sm:$0xf]
        %v771 = vld [vmem:[#allocation2 + $0x14] sm:$0xf]
        %v772 = vld [vmem:[#allocation2 + $0x18] sm:$0xf]
        %v773 = vld [vmem:[#allocation2 + $0x1c] sm:$0xf]
        %v774 = vld [vmem:[#allocation2 + $0x20] sm:$0xf]
        %v775 = vld [vmem:[#allocation2 + $0x24] sm:$0xf]
        %v776 = vld [vmem:[#allocation2 + $0x28] sm:$0xf]
        %v777 = vld [vmem:[#allocation2 + $0x2c] sm:$0xf]
        %v778 = vld [vmem:[#allocation2 + $0x30] sm:$0xf]
        %v779 = vld [vmem:[#allocation2 + $0x34] sm:$0xf]
        %v780 = vld [vmem:[#allocation2 + $0x38] sm:$0xf]
        %v781 = vld [vmem:[#allocation2 + $0x3c] sm:$0xf]
        %v782 = vld [vmem:[#allocation2 + $0x40] sm:$0xf]
        %v783 = vld [vmem:[#allocation2 + $0x44] sm:$0xf]
        %v784 = vld [vmem:[#allocation2 + $0x48] sm:$0xf]
        %v785 = vld [vmem:[#allocation2 + $0x4c] sm:$0xf]
        %v786 = vld [vmem:[#allocation2 + $0x50] sm:$0xf]
        %v787 = vld [vmem:[#allocation2 + $0x54] sm:$0xf]
        %v788 = vld [vmem:[#allocation2 + $0x58] sm:$0xf]
        %v789 = vld [vmem:[#allocation2 + $0x5c] sm:$0xf]
        %v790 = vld [vmem:[#allocation2 + $0x60] sm:$0xf]
        %v791 = vld [vmem:[#allocation2 + $0x64] sm:$0xf]
        %v792 = vld [vmem:[#allocation2 + $0x68] sm:$0xf]
        %v793 = vld [vmem:[#allocation2 + $0x6c] sm:$0xf]
        %v794 = vld [vmem:[#allocation2 + $0x70] sm:$0xf]
        %v795 = vld [vmem:[#allocation2 + $0x74] sm:$0xf]
        %v796 = vld [vmem:[#allocation2 + $0x78] sm:$0xf]
        %v797 = vld [vmem:[#allocation2 + $0x7c] sm:$0xf]
        %v798 = vld [vmem:[%s333] sm:$0xf]
        %v799 = vld [vmem:[%s333 + $0x4] sm:$0xf]
        %v800 = vld [vmem:[%s333 + $0x8] sm:$0xf]
        %v801 = vld [vmem:[%s333 + $0xc] sm:$0xf]
        %v802 = vld [vmem:[%s333 + $0x10] sm:$0xf]
        %v803 = vld [vmem:[%s333 + $0x14] sm:$0xf]
        %v804 = vld [vmem:[%s333 + $0x18] sm:$0xf]
        %v805 = vld [vmem:[%s333 + $0x1c] sm:$0xf]
        %v806 = vld [vmem:[%s333 + $0x20] sm:$0xf]
        %v807 = vld [vmem:[%s333 + $0x24] sm:$0xf]
        %v808 = vld [vmem:[%s333 + $0x28] sm:$0xf]
        %v809 = vld [vmem:[%s333 + $0x2c] sm:$0xf]
        %v810 = vld [vmem:[%s333 + $0x30] sm:$0xf]
        %v811 = vld [vmem:[%s333 + $0x34] sm:$0xf]
        %v812 = vld [vmem:[%s333 + $0x38] sm:$0xf]
        %v813 = vld [vmem:[%s333 + $0x3c] sm:$0xf]
        %v846 = vunpack.c.l.b16 %v766
        %v847 = vunpack.c.l.b16 %v767
        %v848 = vunpack.c.l.b16 %v768
        %v849 = vunpack.c.l.b16 %v769
        %v850 = vunpack.c.l.b16 %v770
        %v851 = vunpack.c.l.b16 %v771
        %v852 = vunpack.c.l.b16 %v772
        %v853 = vunpack.c.l.b16 %v773
        %v854 = vunpack.c.l.b16 %v774
        %v855 = vunpack.c.l.b16 %v775
        %v856 = vunpack.c.l.b16 %v776
        %v857 = vunpack.c.l.b16 %v777
        %v858 = vunpack.c.l.b16 %v778
        %v859 = vunpack.c.l.b16 %v779
        %v860 = vunpack.c.l.b16 %v780
        %v861 = vunpack.c.l.b16 %v781
        %v862 = vunpack.c.l.b16 %v782
        %v863 = vunpack.c.l.b16 %v783
        %v864 = vunpack.c.l.b16 %v784
        %v865 = vunpack.c.l.b16 %v785
        %v866 = vunpack.c.l.b16 %v786
        %v867 = vunpack.c.l.b16 %v787
        %v868 = vunpack.c.l.b16 %v788
        %v869 = vunpack.c.l.b16 %v789
        %v870 = vunpack.c.l.b16 %v790
        %v871 = vunpack.c.l.b16 %v791
        %v872 = vunpack.c.l.b16 %v792
        %v873 = vunpack.c.l.b16 %v793
        %v874 = vunpack.c.l.b16 %v794
        %v875 = vunpack.c.l.b16 %v795
        %v876 = vunpack.c.l.b16 %v796
        %v877 = vunpack.c.l.b16 %v797
        %v878 = vpack.c.b16 %v847, %v846
        %v879 = vpack.c.b16 %v849, %v848
        %v880 = vpack.c.b16 %v851, %v850
        %v881 = vpack.c.b16 %v853, %v852
        %v882 = vpack.c.b16 %v855, %v854
        %v883 = vpack.c.b16 %v857, %v856
        %v884 = vpack.c.b16 %v859, %v858
        %v885 = vpack.c.b16 %v861, %v860
        %v886 = vpack.c.b16 %v863, %v862
        %v887 = vpack.c.b16 %v865, %v864
        %v888 = vpack.c.b16 %v867, %v866
        %v889 = vpack.c.b16 %v869, %v868
        %v890 = vpack.c.b16 %v871, %v870
        %v891 = vpack.c.b16 %v873, %v872
        %v892 = vpack.c.b16 %v875, %v874
        %v893 = vpack.c.b16 %v877, %v876
        %v926 = vunpack.c.l.b16 %v798
        %v927 = vunpack.c.l.b16 %v799
        %v928 = vunpack.c.l.b16 %v800
        %v929 = vunpack.c.l.b16 %v801
        %v930 = vunpack.c.l.b16 %v802
        %v931 = vunpack.c.l.b16 %v803
        %v932 = vunpack.c.l.b16 %v804
        %v933 = vunpack.c.l.b16 %v805
        %v934 = vunpack.c.l.b16 %v806
        %v935 = vunpack.c.l.b16 %v807
        %v936 = vunpack.c.l.b16 %v808
        %v937 = vunpack.c.l.b16 %v809
        %v938 = vunpack.c.l.b16 %v810
        %v939 = vunpack.c.l.b16 %v811
        %v940 = vunpack.c.l.b16 %v812
        %v941 = vunpack.c.l.b16 %v813
        %v942 = vpack.c.b16 %v927, %v926
        %v943 = vpack.c.b16 %v929, %v928
        %v944 = vpack.c.b16 %v931, %v930
        %v945 = vpack.c.b16 %v933, %v932
        %v946 = vpack.c.b16 %v935, %v934
        %v947 = vpack.c.b16 %v937, %v936
        %v948 = vpack.c.b16 %v939, %v938
        %v949 = vpack.c.b16 %v941, %v940
        %958 = vmatprep.subr.bf16.mxu0 0
        %959 = vmatpush1.bf16.msra.mxu0 %v949
        %960 = vmatprep.subr.bf16.mxu0 0
        %961 = vmatpush1.bf16.msra.mxu0 %v948
        %962 = vmatprep.subr.bf16.mxu0 0
        %963 = vmatpush1.bf16.msra.mxu0 %v947
        %964 = vmatprep.subr.bf16.mxu0 0
        %965 = vmatpush1.bf16.msra.mxu0 %v946
        %966 = vmatprep.subr.bf16.mxu0 0
        %967 = vmatpush1.bf16.msra.mxu0 %v945
        %968 = vmatprep.subr.bf16.mxu0 0
        %969 = vmatpush1.bf16.msra.mxu0 %v944
        %970 = vmatprep.subr.bf16.mxu0 0
        %971 = vmatpush1.bf16.msra.mxu0 %v943
        %972 = vmatprep.subr.bf16.mxu0 0
        %973 = vmatpush1.bf16.msra.mxu0 %v942
        %974 = vmatprep.subr.bf16.mxu0 0
        %975 = vmatpush2.bf16.msra.mxu0 0
        %976 = vmatprep.subr.bf16.mxu0 0
        %977 = vmatpush2.bf16.msra.mxu0 0
        %978 = vmatprep.subr.bf16.mxu0 0
        %979 = vmatpush2.bf16.msra.mxu0 0
        %980 = vmatprep.subr.bf16.mxu0 0
        %981 = vmatpush2.bf16.msra.mxu0 0
        %982 = vmatprep.subr.bf16.mxu0 0
        %983 = vmatpush2.bf16.msra.mxu0 0
        %984 = vmatprep.subr.bf16.mxu0 0
        %985 = vmatpush2.bf16.msra.mxu0 0
        %986 = vmatprep.subr.bf16.mxu0 0
        %987 = vmatpush2.bf16.msra.mxu0 0
        %988 = vmatprep.subr.bf16.mxu0 0
        %989 = vmatpush2.bf16.msra.mxu0 0
        %990 = vmatprep.mubr.bf16.mxu0 0
        %991 = vmatmul.mubr.bf16.gmra.mxu0 %v878
        %v992 = vpop.f32.mrf.mxu0
        %v993 = vadd.f32 0.0, %v992
        %v994 = vpop.f32.mrf.mxu0
        %v995 = vpop.f32.mrf.mxu0
        %v996 = vadd.f32 0.0, %v995
        %v997 = vpop.f32.mrf.mxu0
        %998 = vmatprep.mubr.bf16.mxu0 0
        %999 = vmatmul.mubr.bf16.gmra.mxu0 %v879
        %v1000 = vpop.f32.mrf.mxu0
        %v1001 = vadd.f32 0.0, %v1000
        %v1002 = vpop.f32.mrf.mxu0
        %v1003 = vpop.f32.mrf.mxu0
        %v1004 = vadd.f32 0.0, %v1003
        %v1005 = vpop.f32.mrf.mxu0
        %1006 = vmatprep.mubr.bf16.mxu0 0
        %1007 = vmatmul.mubr.bf16.gmra.mxu0 %v880
        %v1008 = vpop.f32.mrf.mxu0
        %v1009 = vadd.f32 0.0, %v1008
        %v1010 = vpop.f32.mrf.mxu0
        %v1011 = vpop.f32.mrf.mxu0
        %v1012 = vadd.f32 0.0, %v1011
        %v1013 = vpop.f32.mrf.mxu0
        %1014 = vmatprep.mubr.bf16.mxu0 0
        %1015 = vmatmul.mubr.bf16.gmra.mxu0 %v881
        %v1016 = vpop.f32.mrf.mxu0
        %v1017 = vadd.f32 0.0, %v1016
        %v1018 = vpop.f32.mrf.mxu0
        %v1019 = vpop.f32.mrf.mxu0
        %v1020 = vadd.f32 0.0, %v1019
        %v1021 = vpop.f32.mrf.mxu0
        %1022 = vmatprep.mubr.bf16.mxu0 0
        %1023 = vmatmul.mubr.bf16.gmra.mxu0 %v882
        %v1024 = vpop.f32.mrf.mxu0
        %v1025 = vadd.f32 0.0, %v1024
        %v1026 = vpop.f32.mrf.mxu0
        %v1027 = vpop.f32.mrf.mxu0
        %v1028 = vadd.f32 0.0, %v1027
        %v1029 = vpop.f32.mrf.mxu0
        %1030 = vmatprep.mubr.bf16.mxu0 0
        %1031 = vmatmul.mubr.bf16.gmra.mxu0 %v883
        %v1032 = vpop.f32.mrf.mxu0
        %v1033 = vadd.f32 0.0, %v1032
        %v1034 = vpop.f32.mrf.mxu0
        %v1035 = vpop.f32.mrf.mxu0
        %v1036 = vadd.f32 0.0, %v1035
        %v1037 = vpop.f32.mrf.mxu0
        %1038 = vmatprep.mubr.bf16.mxu0 0
        %1039 = vmatmul.mubr.bf16.gmra.mxu0 %v884
        %v1040 = vpop.f32.mrf.mxu0
        %v1041 = vadd.f32 0.0, %v1040
        %v1042 = vpop.f32.mrf.mxu0
        %v1043 = vpop.f32.mrf.mxu0
        %v1044 = vadd.f32 0.0, %v1043
        %v1045 = vpop.f32.mrf.mxu0
        %1046 = vmatprep.mubr.bf16.mxu0 0
        %1047 = vmatmul.mubr.bf16.gmra.mxu0 %v885
        %v1048 = vpop.f32.mrf.mxu0
        %v1049 = vadd.f32 0.0, %v1048
        %v1050 = vpop.f32.mrf.mxu0
        %v1051 = vpop.f32.mrf.mxu0
        %v1052 = vadd.f32 0.0, %v1051
        %v1053 = vpop.f32.mrf.mxu0
        %1054 = vmatprep.mubr.bf16.mxu0 0
        %1055 = vmatmul.mubr.bf16.gmra.mxu0 %v886
        %v1056 = vpop.f32.mrf.mxu0
        %v1057 = vadd.f32 0.0, %v1056
        %v1058 = vpop.f32.mrf.mxu0
        %v1059 = vpop.f32.mrf.mxu0
        %v1060 = vadd.f32 0.0, %v1059
        %v1061 = vpop.f32.mrf.mxu0
        %1062 = vmatprep.mubr.bf16.mxu0 0
        %1063 = vmatmul.mubr.bf16.gmra.mxu0 %v887
        %v1064 = vpop.f32.mrf.mxu0
        %v1065 = vadd.f32 0.0, %v1064
        %v1066 = vpop.f32.mrf.mxu0
        %v1067 = vpop.f32.mrf.mxu0
        %v1068 = vadd.f32 0.0, %v1067
        %v1069 = vpop.f32.mrf.mxu0
        %1070 = vmatprep.mubr.bf16.mxu0 0
        %1071 = vmatmul.mubr.bf16.gmra.mxu0 %v888
        %v1072 = vpop.f32.mrf.mxu0
        %v1073 = vadd.f32 0.0, %v1072
        %v1074 = vpop.f32.mrf.mxu0
        %v1075 = vpop.f32.mrf.mxu0
        %v1076 = vadd.f32 0.0, %v1075
        %v1077 = vpop.f32.mrf.mxu0
        %1078 = vmatprep.mubr.bf16.mxu0 0
        %1079 = vmatmul.mubr.bf16.gmra.mxu0 %v889
        %v1080 = vpop.f32.mrf.mxu0
        %v1081 = vadd.f32 0.0, %v1080
        %v1082 = vpop.f32.mrf.mxu0
        %v1083 = vpop.f32.mrf.mxu0
        %v1084 = vadd.f32 0.0, %v1083
        %v1085 = vpop.f32.mrf.mxu0
        %1086 = vmatprep.mubr.bf16.mxu0 0
        %1087 = vmatmul.mubr.bf16.gmra.mxu0 %v890
        %v1088 = vpop.f32.mrf.mxu0
        %v1089 = vadd.f32 0.0, %v1088
        %v1090 = vpop.f32.mrf.mxu0
        %v1091 = vpop.f32.mrf.mxu0
        %v1092 = vadd.f32 0.0, %v1091
        %v1093 = vpop.f32.mrf.mxu0
        %1094 = vmatprep.mubr.bf16.mxu0 0
        %1095 = vmatmul.mubr.bf16.gmra.mxu0 %v891
        %v1096 = vpop.f32.mrf.mxu0
        %v1097 = vadd.f32 0.0, %v1096
        %v1098 = vpop.f32.mrf.mxu0
        %v1099 = vpop.f32.mrf.mxu0
        %v1100 = vadd.f32 0.0, %v1099
        %v1101 = vpop.f32.mrf.mxu0
        %1102 = vmatprep.mubr.bf16.mxu0 0
        %1103 = vmatmul.mubr.bf16.gmra.mxu0 %v892
        %v1104 = vpop.f32.mrf.mxu0
        %v1105 = vadd.f32 0.0, %v1104
        %v1106 = vpop.f32.mrf.mxu0
        %v1107 = vpop.f32.mrf.mxu0
        %v1108 = vadd.f32 0.0, %v1107
        %v1109 = vpop.f32.mrf.mxu0
        %1110 = vmatprep.mubr.bf16.mxu0 0
        %1111 = vmatmul.mubr.bf16.gmra.mxu0 %v893
        %v1112 = vpop.f32.mrf.mxu0
        %v1113 = vadd.f32 0.0, %v1112
        %v1114 = vpop.f32.mrf.mxu0
        %v1115 = vpop.f32.mrf.mxu0
        %v1116 = vadd.f32 0.0, %v1115
        %v1117 = vpop.f32.mrf.mxu0
        %1118 = vdwg.mxu0
        %v1119 = vld [vmem:[#allocation10] sm:$0xff]
        %v1120 = vld [vmem:[#allocation10 + $0x8] sm:$0xff]
        %v1121 = vld [vmem:[#allocation10 + $0x10] sm:$0xff]
        %v1122 = vld [vmem:[#allocation10 + $0x18] sm:$0xff]
        %v1123 = vld [vmem:[#allocation10 + $0x20] sm:$0xff]
        %v1124 = vld [vmem:[#allocation10 + $0x28] sm:$0xff]
        %v1125 = vld [vmem:[#allocation10 + $0x30] sm:$0xff]
        %v1126 = vld [vmem:[#allocation10 + $0x38] sm:$0xff]
        %v1127 = vld [vmem:[#allocation10 + $0x40] sm:$0xff]
        %v1128 = vld [vmem:[#allocation10 + $0x48] sm:$0xff]
        %v1129 = vld [vmem:[#allocation10 + $0x50] sm:$0xff]
        %v1130 = vld [vmem:[#allocation10 + $0x58] sm:$0xff]
        %v1131 = vld [vmem:[#allocation10 + $0x60] sm:$0xff]
        %v1132 = vld [vmem:[#allocation10 + $0x68] sm:$0xff]
        %v1133 = vld [vmem:[#allocation10 + $0x70] sm:$0xff]
        %v1134 = vld [vmem:[#allocation10 + $0x78] sm:$0xff]
        %v1135 = vld [vmem:[#allocation10 + $0x80] sm:$0xff]
        %v1136 = vld [vmem:[#allocation10 + $0x88] sm:$0xff]
        %v1137 = vld [vmem:[#allocation10 + $0x90] sm:$0xff]
        %v1138 = vld [vmem:[#allocation10 + $0x98] sm:$0xff]
        %v1139 = vld [vmem:[#allocation10 + $0xa0] sm:$0xff]
        %v1140 = vld [vmem:[#allocation10 + $0xa8] sm:$0xff]
        %v1141 = vld [vmem:[#allocation10 + $0xb0] sm:$0xff]
        %v1142 = vld [vmem:[#allocation10 + $0xb8] sm:$0xff]
        %v1143 = vld [vmem:[#allocation10 + $0xc0] sm:$0xff]
        %v1144 = vld [vmem:[#allocation10 + $0xc8] sm:$0xff]
        %v1145 = vld [vmem:[#allocation10 + $0xd0] sm:$0xff]
        %v1146 = vld [vmem:[#allocation10 + $0xd8] sm:$0xff]
        %v1147 = vld [vmem:[#allocation10 + $0xe0] sm:$0xff]
        %v1148 = vld [vmem:[#allocation10 + $0xe8] sm:$0xff]
        %v1149 = vld [vmem:[#allocation10 + $0xf0] sm:$0xff]
        %v1150 = vld [vmem:[#allocation10 + $0xf8] sm:$0xff]
        %v1151 = vld [vmem:[%s324] sm:$0xff]
        %v1152 = vld [vmem:[%s324 + $0x8] sm:$0xff]
        %v1153 = vld [vmem:[%s324 + $0x10] sm:$0xff]
        %v1154 = vld [vmem:[%s324 + $0x18] sm:$0xff]
        %v1155 = vld [vmem:[%s324 + $0x20] sm:$0xff]
        %v1156 = vld [vmem:[%s324 + $0x28] sm:$0xff]
        %v1157 = vld [vmem:[%s324 + $0x30] sm:$0xff]
        %v1158 = vld [vmem:[%s324 + $0x38] sm:$0xff]
        %v1159 = vld [vmem:[%s324 + $0x40] sm:$0xff]
        %v1160 = vld [vmem:[%s324 + $0x48] sm:$0xff]
        %v1161 = vld [vmem:[%s324 + $0x50] sm:$0xff]
        %v1162 = vld [vmem:[%s324 + $0x58] sm:$0xff]
        %v1163 = vld [vmem:[%s324 + $0x60] sm:$0xff]
        %v1164 = vld [vmem:[%s324 + $0x68] sm:$0xff]
        %v1165 = vld [vmem:[%s324 + $0x70] sm:$0xff]
        %v1166 = vld [vmem:[%s324 + $0x78] sm:$0xff]
        %v1167 = vld [vmem:[%s324 + $0x80] sm:$0xff]
        %v1168 = vld [vmem:[%s324 + $0x88] sm:$0xff]
        %v1169 = vld [vmem:[%s324 + $0x90] sm:$0xff]
        %v1170 = vld [vmem:[%s324 + $0x98] sm:$0xff]
        %v1171 = vld [vmem:[%s324 + $0xa0] sm:$0xff]
        %v1172 = vld [vmem:[%s324 + $0xa8] sm:$0xff]
        %v1173 = vld [vmem:[%s324 + $0xb0] sm:$0xff]
        %v1174 = vld [vmem:[%s324 + $0xb8] sm:$0xff]
        %v1175 = vld [vmem:[%s324 + $0xc0] sm:$0xff]
        %v1176 = vld [vmem:[%s324 + $0xc8] sm:$0xff]
        %v1177 = vld [vmem:[%s324 + $0xd0] sm:$0xff]
        %v1178 = vld [vmem:[%s324 + $0xd8] sm:$0xff]
        %v1179 = vld [vmem:[%s324 + $0xe0] sm:$0xff]
        %v1180 = vld [vmem:[%s324 + $0xe8] sm:$0xff]
        %v1181 = vld [vmem:[%s324 + $0xf0] sm:$0xff]
        %v1182 = vld [vmem:[%s324 + $0xf8] sm:$0xff]
        %v1183 = vpack.c.bf16 %v996, %v993
        %v1184 = vpack.c.bf16 %v1004, %v1001
        %v1185 = vpack.c.bf16 %v1012, %v1009
        %v1186 = vpack.c.bf16 %v1020, %v1017
        %v1187 = vpack.c.bf16 %v1028, %v1025
        %v1188 = vpack.c.bf16 %v1036, %v1033
        %v1189 = vpack.c.bf16 %v1044, %v1041
        %v1190 = vpack.c.bf16 %v1052, %v1049
        %v1191 = vpack.c.bf16 %v1060, %v1057
        %v1192 = vpack.c.bf16 %v1068, %v1065
        %v1193 = vpack.c.bf16 %v1076, %v1073
        %v1194 = vpack.c.bf16 %v1084, %v1081
        %v1195 = vpack.c.bf16 %v1092, %v1089
        %v1196 = vpack.c.bf16 %v1100, %v1097
        %v1197 = vpack.c.bf16 %v1108, %v1105
        %v1198 = vpack.c.bf16 %v1116, %v1113
        %v1231 = vunpack.c.l.b16 %v1151
        %v1232 = vunpack.c.h.b16 %v1151
        %v1233 = vunpack.c.l.b16 %v1152
        %v1234 = vunpack.c.h.b16 %v1152
        %v1235 = vunpack.c.l.b16 %v1153
        %v1236 = vunpack.c.h.b16 %v1153
        %v1237 = vunpack.c.l.b16 %v1154
        %v1238 = vunpack.c.h.b16 %v1154
        %v1239 = vunpack.c.l.b16 %v1155
        %v1240 = vunpack.c.h.b16 %v1155
        %v1241 = vunpack.c.l.b16 %v1156
        %v1242 = vunpack.c.h.b16 %v1156
        %v1243 = vunpack.c.l.b16 %v1157
        %v1244 = vunpack.c.h.b16 %v1157
        %v1245 = vunpack.c.l.b16 %v1158
        %v1246 = vunpack.c.h.b16 %v1158
        %v1247 = vunpack.c.l.b16 %v1159
        %v1248 = vunpack.c.h.b16 %v1159
        %v1249 = vunpack.c.l.b16 %v1160
        %v1250 = vunpack.c.h.b16 %v1160
        %v1251 = vunpack.c.l.b16 %v1161
        %v1252 = vunpack.c.h.b16 %v1161
        %v1253 = vunpack.c.l.b16 %v1162
        %v1254 = vunpack.c.h.b16 %v1162
        %v1255 = vunpack.c.l.b16 %v1163
        %v1256 = vunpack.c.h.b16 %v1163
        %v1257 = vunpack.c.l.b16 %v1164
        %v1258 = vunpack.c.h.b16 %v1164
        %v1259 = vunpack.c.l.b16 %v1165
        %v1260 = vunpack.c.h.b16 %v1165
        %v1261 = vunpack.c.l.b16 %v1166
        %v1262 = vunpack.c.h.b16 %v1166
        %v1263 = vunpack.c.l.b16 %v1167
        %v1264 = vunpack.c.h.b16 %v1167
        %v1265 = vunpack.c.l.b16 %v1168
        %v1266 = vunpack.c.h.b16 %v1168
        %v1267 = vunpack.c.l.b16 %v1169
        %v1268 = vunpack.c.h.b16 %v1169
        %v1269 = vunpack.c.l.b16 %v1170
        %v1270 = vunpack.c.h.b16 %v1170
        %v1271 = vunpack.c.l.b16 %v1171
        %v1272 = vunpack.c.h.b16 %v1171
        %v1273 = vunpack.c.l.b16 %v1172
        %v1274 = vunpack.c.h.b16 %v1172
        %v1275 = vunpack.c.l.b16 %v1173
        %v1276 = vunpack.c.h.b16 %v1173
        %v1277 = vunpack.c.l.b16 %v1174
        %v1278 = vunpack.c.h.b16 %v1174
        %v1279 = vunpack.c.l.b16 %v1175
        %v1280 = vunpack.c.h.b16 %v1175
        %v1281 = vunpack.c.l.b16 %v1176
        %v1282 = vunpack.c.h.b16 %v1176
        %v1283 = vunpack.c.l.b16 %v1177
        %v1284 = vunpack.c.h.b16 %v1177
        %v1285 = vunpack.c.l.b16 %v1178
        %v1286 = vunpack.c.h.b16 %v1178
        %v1287 = vunpack.c.l.b16 %v1179
        %v1288 = vunpack.c.h.b16 %v1179
        %v1289 = vunpack.c.l.b16 %v1180
        %v1290 = vunpack.c.h.b16 %v1180
        %v1291 = vunpack.c.l.b16 %v1181
        %v1292 = vunpack.c.h.b16 %v1181
        %v1293 = vunpack.c.l.b16 %v1182
        %v1294 = vunpack.c.h.b16 %v1182
        %v1295 = vpack.c.b16 %v1233, %v1231
        %v1296 = vpack.c.b16 %v1234, %v1232
        %v1297 = vpack.c.b16 %v1237, %v1235
        %v1298 = vpack.c.b16 %v1238, %v1236
        %v1299 = vpack.c.b16 %v1241, %v1239
        %v1300 = vpack.c.b16 %v1242, %v1240
        %v1301 = vpack.c.b16 %v1245, %v1243
        %v1302 = vpack.c.b16 %v1246, %v1244
        %v1303 = vpack.c.b16 %v1249, %v1247
        %v1304 = vpack.c.b16 %v1250, %v1248
        %v1305 = vpack.c.b16 %v1253, %v1251
        %v1306 = vpack.c.b16 %v1254, %v1252
        %v1307 = vpack.c.b16 %v1257, %v1255
        %v1308 = vpack.c.b16 %v1258, %v1256
        %v1309 = vpack.c.b16 %v1261, %v1259
        %v1310 = vpack.c.b16 %v1262, %v1260
        %v1311 = vpack.c.b16 %v1265, %v1263
        %v1312 = vpack.c.b16 %v1266, %v1264
        %v1313 = vpack.c.b16 %v1269, %v1267
        %v1314 = vpack.c.b16 %v1270, %v1268
        %v1315 = vpack.c.b16 %v1273, %v1271
        %v1316 = vpack.c.b16 %v1274, %v1272
        %v1317 = vpack.c.b16 %v1277, %v1275
        %v1318 = vpack.c.b16 %v1278, %v1276
        %v1319 = vpack.c.b16 %v1281, %v1279
        %v1320 = vpack.c.b16 %v1282, %v1280
        %v1321 = vpack.c.b16 %v1285, %v1283
        %v1322 = vpack.c.b16 %v1286, %v1284
        %v1323 = vpack.c.b16 %v1289, %v1287
        %v1324 = vpack.c.b16 %v1290, %v1288
        %v1325 = vpack.c.b16 %v1293, %v1291
        %v1326 = vpack.c.b16 %v1294, %v1292
        %1359 = vmatprep.subr.bf16.mxu0 0
        %1360 = vmatpush1.bf16.msra.mxu0 %v1190
        %1361 = vmatprep.subr.bf16.mxu0 0
        %1362 = vmatpush1.bf16.msra.mxu0 %v1189
        %1363 = vmatprep.subr.bf16.mxu0 0
        %1364 = vmatpush1.bf16.msra.mxu0 %v1188
        %1365 = vmatprep.subr.bf16.mxu0 0
        %1366 = vmatpush1.bf16.msra.mxu0 %v1187
        %1367 = vmatprep.subr.bf16.mxu0 0
        %1368 = vmatpush1.bf16.msra.mxu0 %v1186
        %1369 = vmatprep.subr.bf16.mxu0 0
        %1370 = vmatpush1.bf16.msra.mxu0 %v1185
        %1371 = vmatprep.subr.bf16.mxu0 0
        %1372 = vmatpush1.bf16.msra.mxu0 %v1184
        %1373 = vmatprep.subr.bf16.mxu0 0
        %1374 = vmatpush1.bf16.msra.mxu0 %v1183
        %1375 = vmatprep.subr.bf16.mxu0 0
        %1376 = vmatpush2.bf16.msra.mxu0 %v1198
        %1377 = vmatprep.subr.bf16.mxu0 0
        %1378 = vmatpush2.bf16.msra.mxu0 %v1197
        %1379 = vmatprep.subr.bf16.mxu0 0
        %1380 = vmatpush2.bf16.msra.mxu0 %v1196
        %1381 = vmatprep.subr.bf16.mxu0 0
        %1382 = vmatpush2.bf16.msra.mxu0 %v1195
        %1383 = vmatprep.subr.bf16.mxu0 0
        %1384 = vmatpush2.bf16.msra.mxu0 %v1194
        %1385 = vmatprep.subr.bf16.mxu0 0
        %1386 = vmatpush2.bf16.msra.mxu0 %v1193
        %1387 = vmatprep.subr.bf16.mxu0 0
        %1388 = vmatpush2.bf16.msra.mxu0 %v1192
        %1389 = vmatprep.subr.bf16.mxu0 0
        %1390 = vmatpush2.bf16.msra.mxu0 %v1191
        %1391 = vmatprep.mubr.bf16.mxu0 %v1296
        %1392 = vmatmul.mubr.bf16.gmra.mxu0 %v1295
        %v1393 = vpop.f32.mrf.mxu0
        %v1394 = vadd.f32 0.0, %v1393
        %v1395 = vpop.f32.mrf.mxu0
        %v1396 = vpop.f32.mrf.mxu0
        %v1397 = vadd.f32 0.0, %v1396
        %v1398 = vpop.f32.mrf.mxu0
        %1399 = vmatprep.mubr.bf16.mxu0 %v1298
        %1400 = vmatmul.mubr.bf16.gmra.mxu0 %v1297
        %v1401 = vpop.f32.mrf.mxu0
        %v1402 = vadd.f32 0.0, %v1401
        %v1403 = vpop.f32.mrf.mxu0
        %v1404 = vpop.f32.mrf.mxu0
        %v1405 = vadd.f32 0.0, %v1404
        %v1406 = vpop.f32.mrf.mxu0
        %1407 = vmatprep.mubr.bf16.mxu0 %v1300
        %1408 = vmatmul.mubr.bf16.gmra.mxu0 %v1299
        %v1409 = vpop.f32.mrf.mxu0
        %v1410 = vadd.f32 0.0, %v1409
        %v1411 = vpop.f32.mrf.mxu0
        %v1412 = vpop.f32.mrf.mxu0
        %v1413 = vadd.f32 0.0, %v1412
        %v1414 = vpop.f32.mrf.mxu0
        %1415 = vmatprep.mubr.bf16.mxu0 %v1302
        %1416 = vmatmul.mubr.bf16.gmra.mxu0 %v1301
        %v1417 = vpop.f32.mrf.mxu0
        %v1418 = vadd.f32 0.0, %v1417
        %v1419 = vpop.f32.mrf.mxu0
        %v1420 = vpop.f32.mrf.mxu0
        %v1421 = vadd.f32 0.0, %v1420
        %v1422 = vpop.f32.mrf.mxu0
        %1423 = vmatprep.mubr.bf16.mxu0 %v1304
        %1424 = vmatmul.mubr.bf16.gmra.mxu0 %v1303
        %v1425 = vpop.f32.mrf.mxu0
        %v1426 = vadd.f32 0.0, %v1425
        %v1427 = vpop.f32.mrf.mxu0
        %v1428 = vpop.f32.mrf.mxu0
        %v1429 = vadd.f32 0.0, %v1428
        %v1430 = vpop.f32.mrf.mxu0
        %1431 = vmatprep.mubr.bf16.mxu0 %v1306
        %1432 = vmatmul.mubr.bf16.gmra.mxu0 %v1305
        %v1433 = vpop.f32.mrf.mxu0
        %v1434 = vadd.f32 0.0, %v1433
        %v1435 = vpop.f32.mrf.mxu0
        %v1436 = vpop.f32.mrf.mxu0
        %v1437 = vadd.f32 0.0, %v1436
        %v1438 = vpop.f32.mrf.mxu0
        %1439 = vmatprep.mubr.bf16.mxu0 %v1308
        %1440 = vmatmul.mubr.bf16.gmra.mxu0 %v1307
        %v1441 = vpop.f32.mrf.mxu0
        %v1442 = vadd.f32 0.0, %v1441
        %v1443 = vpop.f32.mrf.mxu0
        %v1444 = vpop.f32.mrf.mxu0
        %v1445 = vadd.f32 0.0, %v1444
        %v1446 = vpop.f32.mrf.mxu0
        %1447 = vmatprep.mubr.bf16.mxu0 %v1310
        %1448 = vmatmul.mubr.bf16.gmra.mxu0 %v1309
        %v1449 = vpop.f32.mrf.mxu0
        %v1450 = vadd.f32 0.0, %v1449
        %v1451 = vpop.f32.mrf.mxu0
        %v1452 = vpop.f32.mrf.mxu0
        %v1453 = vadd.f32 0.0, %v1452
        %v1454 = vpop.f32.mrf.mxu0
        %1455 = vmatprep.mubr.bf16.mxu0 %v1312
        %1456 = vmatmul.mubr.bf16.gmra.mxu0 %v1311
        %v1457 = vpop.f32.mrf.mxu0
        %v1458 = vadd.f32 0.0, %v1457
        %v1459 = vpop.f32.mrf.mxu0
        %v1460 = vpop.f32.mrf.mxu0
        %v1461 = vadd.f32 0.0, %v1460
        %v1462 = vpop.f32.mrf.mxu0
        %1463 = vmatprep.mubr.bf16.mxu0 %v1314
        %1464 = vmatmul.mubr.bf16.gmra.mxu0 %v1313
        %v1465 = vpop.f32.mrf.mxu0
        %v1466 = vadd.f32 0.0, %v1465
        %v1467 = vpop.f32.mrf.mxu0
        %v1468 = vpop.f32.mrf.mxu0
        %v1469 = vadd.f32 0.0, %v1468
        %v1470 = vpop.f32.mrf.mxu0
        %1471 = vmatprep.mubr.bf16.mxu0 %v1316
        %1472 = vmatmul.mubr.bf16.gmra.mxu0 %v1315
        %v1473 = vpop.f32.mrf.mxu0
        %v1474 = vadd.f32 0.0, %v1473
        %v1475 = vpop.f32.mrf.mxu0
        %v1476 = vpop.f32.mrf.mxu0
        %v1477 = vadd.f32 0.0, %v1476
        %v1478 = vpop.f32.mrf.mxu0
        %1479 = vmatprep.mubr.bf16.mxu0 %v1318
        %1480 = vmatmul.mubr.bf16.gmra.mxu0 %v1317
        %v1481 = vpop.f32.mrf.mxu0
        %v1482 = vadd.f32 0.0, %v1481
        %v1483 = vpop.f32.mrf.mxu0
        %v1484 = vpop.f32.mrf.mxu0
        %v1485 = vadd.f32 0.0, %v1484
        %v1486 = vpop.f32.mrf.mxu0
        %1487 = vmatprep.mubr.bf16.mxu0 %v1320
        %1488 = vmatmul.mubr.bf16.gmra.mxu0 %v1319
        %v1489 = vpop.f32.mrf.mxu0
        %v1490 = vadd.f32 0.0, %v1489
        %v1491 = vpop.f32.mrf.mxu0
        %v1492 = vpop.f32.mrf.mxu0
        %v1493 = vadd.f32 0.0, %v1492
        %v1494 = vpop.f32.mrf.mxu0
        %1495 = vmatprep.mubr.bf16.mxu0 %v1322
        %1496 = vmatmul.mubr.bf16.gmra.mxu0 %v1321
        %v1497 = vpop.f32.mrf.mxu0
        %v1498 = vadd.f32 0.0, %v1497
        %v1499 = vpop.f32.mrf.mxu0
        %v1500 = vpop.f32.mrf.mxu0
        %v1501 = vadd.f32 0.0, %v1500
        %v1502 = vpop.f32.mrf.mxu0
        %1503 = vmatprep.mubr.bf16.mxu0 %v1324
        %1504 = vmatmul.mubr.bf16.gmra.mxu0 %v1323
        %v1505 = vpop.f32.mrf.mxu0
        %v1506 = vadd.f32 0.0, %v1505
        %v1507 = vpop.f32.mrf.mxu0
        %v1508 = vpop.f32.mrf.mxu0
        %v1509 = vadd.f32 0.0, %v1508
        %v1510 = vpop.f32.mrf.mxu0
        %1511 = vmatprep.mubr.bf16.mxu0 %v1326
        %1512 = vmatmul.mubr.bf16.gmra.mxu0 %v1325
        %v1513 = vpop.f32.mrf.mxu0
        %v1514 = vadd.f32 0.0, %v1513
        %v1515 = vpop.f32.mrf.mxu0
        %v1516 = vpop.f32.mrf.mxu0
        %v1517 = vadd.f32 0.0, %v1516
        %v1518 = vpop.f32.mrf.mxu0
        %1519 = vdwg.mxu0
        %v1520 = vadd.f32 %v1119, %v1394
        %v1521 = vadd.f32 %v1120, %v1397
        %v1522 = vadd.f32 %v1121, %v1402
        %v1523 = vadd.f32 %v1122, %v1405
        %v1524 = vadd.f32 %v1123, %v1410
        %v1525 = vadd.f32 %v1124, %v1413
        %v1526 = vadd.f32 %v1125, %v1418
        %v1527 = vadd.f32 %v1126, %v1421
        %v1528 = vadd.f32 %v1127, %v1426
        %v1529 = vadd.f32 %v1128, %v1429
        %v1530 = vadd.f32 %v1129, %v1434
        %v1531 = vadd.f32 %v1130, %v1437
        %v1532 = vadd.f32 %v1131, %v1442
        %v1533 = vadd.f32 %v1132, %v1445
        %v1534 = vadd.f32 %v1133, %v1450
        %v1535 = vadd.f32 %v1134, %v1453
        %v1536 = vadd.f32 %v1135, %v1458
        %v1537 = vadd.f32 %v1136, %v1461
        %v1538 = vadd.f32 %v1137, %v1466
        %v1539 = vadd.f32 %v1138, %v1469
        %v1540 = vadd.f32 %v1139, %v1474
        %v1541 = vadd.f32 %v1140, %v1477
        %v1542 = vadd.f32 %v1141, %v1482
        %v1543 = vadd.f32 %v1142, %v1485
        %v1544 = vadd.f32 %v1143, %v1490
        %v1545 = vadd.f32 %v1144, %v1493
        %v1546 = vadd.f32 %v1145, %v1498
        %v1547 = vadd.f32 %v1146, %v1501
        %v1548 = vadd.f32 %v1147, %v1506
        %v1549 = vadd.f32 %v1148, %v1509
        %v1550 = vadd.f32 %v1149, %v1514
        %v1551 = vadd.f32 %v1150, %v1517
        %1552 = vst [vmem:[#allocation10] sm:$0xff] %v1520
        %1553 = vst [vmem:[#allocation10 + $0x8] sm:$0xff] %v1521
        %1554 = vst [vmem:[#allocation10 + $0x10] sm:$0xff] %v1522
        %1555 = vst [vmem:[#allocation10 + $0x18] sm:$0xff] %v1523
        %1556 = vst [vmem:[#allocation10 + $0x20] sm:$0xff] %v1524
        %1557 = vst [vmem:[#allocation10 + $0x28] sm:$0xff] %v1525
        %1558 = vst [vmem:[#allocation10 + $0x30] sm:$0xff] %v1526
        %1559 = vst [vmem:[#allocation10 + $0x38] sm:$0xff] %v1527
        %1560 = vst [vmem:[#allocation10 + $0x40] sm:$0xff] %v1528
        %1561 = vst [vmem:[#allocation10 + $0x48] sm:$0xff] %v1529
        %1562 = vst [vmem:[#allocation10 + $0x50] sm:$0xff] %v1530
        %1563 = vst [vmem:[#allocation10 + $0x58] sm:$0xff] %v1531
        %1564 = vst [vmem:[#allocation10 + $0x60] sm:$0xff] %v1532
        %1565 = vst [vmem:[#allocation10 + $0x68] sm:$0xff] %v1533
        %1566 = vst [vmem:[#allocation10 + $0x70] sm:$0xff] %v1534
        %1567 = vst [vmem:[#allocation10 + $0x78] sm:$0xff] %v1535
        %1568 = vst [vmem:[#allocation10 + $0x80] sm:$0xff] %v1536
        %1569 = vst [vmem:[#allocation10 + $0x88] sm:$0xff] %v1537
        %1570 = vst [vmem:[#allocation10 + $0x90] sm:$0xff] %v1538
        %1571 = vst [vmem:[#allocation10 + $0x98] sm:$0xff] %v1539
        %1572 = vst [vmem:[#allocation10 + $0xa0] sm:$0xff] %v1540
        %1573 = vst [vmem:[#allocation10 + $0xa8] sm:$0xff] %v1541
        %1574 = vst [vmem:[#allocation10 + $0xb0] sm:$0xff] %v1542
        %1575 = vst [vmem:[#allocation10 + $0xb8] sm:$0xff] %v1543
        %1576 = vst [vmem:[#allocation10 + $0xc0] sm:$0xff] %v1544
        %1577 = vst [vmem:[#allocation10 + $0xc8] sm:$0xff] %v1545
        %1578 = vst [vmem:[#allocation10 + $0xd0] sm:$0xff] %v1546
        %1579 = vst [vmem:[#allocation10 + $0xd8] sm:$0xff] %v1547
        %1580 = vst [vmem:[#allocation10 + $0xe0] sm:$0xff] %v1548
        %1581 = vst [vmem:[#allocation10 + $0xe8] sm:$0xff] %v1549
        %1582 = vst [vmem:[#allocation10 + $0xf0] sm:$0xff] %v1550
        %1583 = vst [vmem:[#allocation10 + $0xf8] sm:$0xff] %v1551
        %p1584 = scmp.eq.s32.totalorder %s25, 3
        // Predicated region
        $region69: #{tpu_custom_call.1} parent=43 // pred_check
          %p1585 = pneg %p1584
        $region70: #{tpu_custom_call.1} parent=43 // pred_check_branch
          %1587 = sbr.rel (%p1585) target = $region72
        $region71: #{tpu_custom_call.1} parent=43 // pred_region
          %v1588 = vld [vmem:[#allocation10] sm:$0xff]
          %v1589 = vld [vmem:[#allocation10 + $0x8] sm:$0xff]
          %v1590 = vld [vmem:[#allocation10 + $0x10] sm:$0xff]
          %v1591 = vld [vmem:[#allocation10 + $0x18] sm:$0xff]
          %v1592 = vld [vmem:[#allocation10 + $0x20] sm:$0xff]
          %v1593 = vld [vmem:[#allocation10 + $0x28] sm:$0xff]
          %v1594 = vld [vmem:[#allocation10 + $0x30] sm:$0xff]
          %v1595 = vld [vmem:[#allocation10 + $0x38] sm:$0xff]
          %v1596 = vld [vmem:[#allocation10 + $0x40] sm:$0xff]
          %v1597 = vld [vmem:[#allocation10 + $0x48] sm:$0xff]
          %v1598 = vld [vmem:[#allocation10 + $0x50] sm:$0xff]
          %v1599 = vld [vmem:[#allocation10 + $0x58] sm:$0xff]
          %v1600 = vld [vmem:[#allocation10 + $0x60] sm:$0xff]
          %v1601 = vld [vmem:[#allocation10 + $0x68] sm:$0xff]
          %v1602 = vld [vmem:[#allocation10 + $0x70] sm:$0xff]
          %v1603 = vld [vmem:[#allocation10 + $0x78] sm:$0xff]
          %v1604 = vld [vmem:[#allocation10 + $0x80] sm:$0xff]
          %v1605 = vld [vmem:[#allocation10 + $0x88] sm:$0xff]
          %v1606 = vld [vmem:[#allocation10 + $0x90] sm:$0xff]
          %v1607 = vld [vmem:[#allocation10 + $0x98] sm:$0xff]
          %v1608 = vld [vmem:[#allocation10 + $0xa0] sm:$0xff]
          %v1609 = vld [vmem:[#allocation10 + $0xa8] sm:$0xff]
          %v1610 = vld [vmem:[#allocation10 + $0xb0] sm:$0xff]
          %v1611 = vld [vmem:[#allocation10 + $0xb8] sm:$0xff]
          %v1612 = vld [vmem:[#allocation10 + $0xc0] sm:$0xff]
          %v1613 = vld [vmem:[#allocation10 + $0xc8] sm:$0xff]
          %v1614 = vld [vmem:[#allocation10 + $0xd0] sm:$0xff]
          %v1615 = vld [vmem:[#allocation10 + $0xd8] sm:$0xff]
          %v1616 = vld [vmem:[#allocation10 + $0xe0] sm:$0xff]
          %v1617 = vld [vmem:[#allocation10 + $0xe8] sm:$0xff]
          %v1618 = vld [vmem:[#allocation10 + $0xf0] sm:$0xff]
          %v1619 = vld [vmem:[#allocation10 + $0xf8] sm:$0xff]
          %v1620 = vmax.f32 %v1588, 0.0
          %v1621 = vmax.f32 %v1589, 0.0
          %v1622 = vmax.f32 %v1590, 0.0
          %v1623 = vmax.f32 %v1591, 0.0
          %v1624 = vmax.f32 %v1592, 0.0
          %v1625 = vmax.f32 %v1593, 0.0
          %v1626 = vmax.f32 %v1594, 0.0
          %v1627 = vmax.f32 %v1595, 0.0
          %v1628 = vmax.f32 %v1596, 0.0
          %v1629 = vmax.f32 %v1597, 0.0
          %v1630 = vmax.f32 %v1598, 0.0
          %v1631 = vmax.f32 %v1599, 0.0
          %v1632 = vmax.f32 %v1600, 0.0
          %v1633 = vmax.f32 %v1601, 0.0
          %v1634 = vmax.f32 %v1602, 0.0
          %v1635 = vmax.f32 %v1603, 0.0
          %v1636 = vmax.f32 %v1604, 0.0
          %v1637 = vmax.f32 %v1605, 0.0
          %v1638 = vmax.f32 %v1606, 0.0
          %v1639 = vmax.f32 %v1607, 0.0
          %v1640 = vmax.f32 %v1608, 0.0
          %v1641 = vmax.f32 %v1609, 0.0
          %v1642 = vmax.f32 %v1610, 0.0
          %v1643 = vmax.f32 %v1611, 0.0
          %v1644 = vmax.f32 %v1612, 0.0
          %v1645 = vmax.f32 %v1613, 0.0
          %v1646 = vmax.f32 %v1614, 0.0
          %v1647 = vmax.f32 %v1615, 0.0
          %v1648 = vmax.f32 %v1616, 0.0
          %v1649 = vmax.f32 %v1617, 0.0
          %v1650 = vmax.f32 %v1618, 0.0
          %v1651 = vmax.f32 %v1619, 0.0
          %1652 = vst [vmem:[#allocation10] sm:$0xff] %v1620
          %1653 = vst [vmem:[#allocation10 + $0x8] sm:$0xff] %v1621
          %1654 = vst [vmem:[#allocation10 + $0x10] sm:$0xff] %v1622
          %1655 = vst [vmem:[#allocation10 + $0x18] sm:$0xff] %v1623
          %1656 = vst [vmem:[#allocation10 + $0x20] sm:$0xff] %v1624
          %1657 = vst [vmem:[#allocation10 + $0x28] sm:$0xff] %v1625
          %1658 = vst [vmem:[#allocation10 + $0x30] sm:$0xff] %v1626
          %1659 = vst [vmem:[#allocation10 + $0x38] sm:$0xff] %v1627
          %1660 = vst [vmem:[#allocation10 + $0x40] sm:$0xff] %v1628
          %1661 = vst [vmem:[#allocation10 + $0x48] sm:$0xff] %v1629
          %1662 = vst [vmem:[#allocation10 + $0x50] sm:$0xff] %v1630
          %1663 = vst [vmem:[#allocation10 + $0x58] sm:$0xff] %v1631
          %1664 = vst [vmem:[#allocation10 + $0x60] sm:$0xff] %v1632
          %1665 = vst [vmem:[#allocation10 + $0x68] sm:$0xff] %v1633
          %1666 = vst [vmem:[#allocation10 + $0x70] sm:$0xff] %v1634
          %1667 = vst [vmem:[#allocation10 + $0x78] sm:$0xff] %v1635
          %1668 = vst [vmem:[#allocation10 + $0x80] sm:$0xff] %v1636
          %1669 = vst [vmem:[#allocation10 + $0x88] sm:$0xff] %v1637
          %1670 = vst [vmem:[#allocation10 + $0x90] sm:$0xff] %v1638
          %1671 = vst [vmem:[#allocation10 + $0x98] sm:$0xff] %v1639
          %1672 = vst [vmem:[#allocation10 + $0xa0] sm:$0xff] %v1640
          %1673 = vst [vmem:[#allocation10 + $0xa8] sm:$0xff] %v1641
          %1674 = vst [vmem:[#allocation10 + $0xb0] sm:$0xff] %v1642
          %1675 = vst [vmem:[#allocation10 + $0xb8] sm:$0xff] %v1643
          %1676 = vst [vmem:[#allocation10 + $0xc0] sm:$0xff] %v1644
          %1677 = vst [vmem:[#allocation10 + $0xc8] sm:$0xff] %v1645
          %1678 = vst [vmem:[#allocation10 + $0xd0] sm:$0xff] %v1646
          %1679 = vst [vmem:[#allocation10 + $0xd8] sm:$0xff] %v1647
          %1680 = vst [vmem:[#allocation10 + $0xe0] sm:$0xff] %v1648
          %1681 = vst [vmem:[#allocation10 + $0xe8] sm:$0xff] %v1649
          %1682 = vst [vmem:[#allocation10 + $0xf0] sm:$0xff] %v1650
          %1683 = vst [vmem:[#allocation10 + $0xf8] sm:$0xff] %v1651
        $region72: #{tpu_custom_call.1} parent=43 // pred_fallthru
          _
        // Predicated region
        $region73: #{tpu_custom_call.1} parent=43 // pred_check
          %p1684 = pneg %p193
        $region74: #{tpu_custom_call.1} parent=43 // pred_check_branch
          %1686 = sbr.rel (%p1684) target = $region76
        $region75: #{tpu_custom_call.1} parent=43 // pred_region
          %s1687 = smul.u32 32, %s24
          %s1689 = ssub.s32 4096, 4096
          %1690 = vsyncadd [#allocation4], %s1689
          %s1691 = smul.addr %s1687, 128
          %s1692 = scalar_lea.hbm %s6, %s1691
          %s1693 = sshll.u32 [#allocation10], 4
          %s1694 = int_to_ptr.vmem [resolvable:$true] %s1693
          %1699 = dma.vmem_to_hbm [thread:$0]  %s1694, 4096, %s1692, [#allocation4], 128, 128, 8
        $region76: #{tpu_custom_call.1} parent=43 // pred_fallthru
          _
        // Predicated region
        $region77: #{tpu_custom_call.1} parent=43 // pred_check
          %p1700 = pneg %p193
        $region78: #{tpu_custom_call.1} parent=43 // pred_check_branch
          %1702 = sbr.rel (%p1700) target = $region80
        $region79: #{tpu_custom_call.1} parent=43 // pred_region
          %1703 = dma.done [#allocation4], 4096
        $region80: #{tpu_custom_call.1} parent=43 // pred_fallthru
          _
      $region44: #{tpu_custom_call.1} parent=5 // pred_fallthru
        _
      %p1704 = scmp.le.s32.totalorder 2, %s15
      // Predicated region
      $region81: #{tpu_custom_call.1} parent=5 // pred_check
        %p1705 = pneg %p1704
      $region82: #{tpu_custom_call.1} parent=5 // pred_check_branch
        %1707 = sbr.rel (%p1705) target = $region84
      $region83: #{tpu_custom_call.1} parent=5 // pred_region
        %s1708 = ssub.s32 %s15, 2
      $region84: #{tpu_custom_call.1} parent=5 // pred_fallthru
        _
    $region6: #{tpu_custom_call.1} parent=1 // loop_footer
      %s19 = sadd.s32 1, %s15
    $region7: #{tpu_custom_call.1} parent=1 // loop_footer_branch
      %14 = sbr.rel target = $region3
    $region8: #{tpu_custom_call.1} parent=1 // loop_exit
      _
    %1709 = vsyncpa [#allocation3], 1
    %s1710 = scalar_lea.sflag [#allocation3], 1
    %1711 = vsyncpa %s1710, 1
    %1712 = vsyncpa [#allocation6], 1
    %1713 = vsyncpa [#allocation4], 1
    %s1714 = scalar_lea.sflag [#allocation4], 1
    %1715 = vsyncpa %s1714, 1

</llo_original>
